<compile_context>
chip_gen: v7x
topology: tpu7x:2x2x1
jax: 0.10.0
libtpu: 0.0.40
codegen_flags: <defaults>
</compile_context>

<pallas_src>
import functools
import math

import jax
import jax.numpy as jnp
from jax.experimental import pallas as pl
from jax.experimental.pallas import tpu as pltpu


# ----------------------------- in-kernel helpers -----------------------------

def _layernorm(x, g, b, eps):
    mean = jnp.mean(x, axis=-1, keepdims=True)
    var = jnp.mean((x - mean) ** 2, axis=-1, keepdims=True)
    return (x - mean) * jax.lax.rsqrt(var + eps) * g + b


def _gelu_tanh(x):
    # TODO(synk): HF/PyTorch BERT default GELU is the exact erf form; the tanh
    # approximation deviates by ~1e-3 from that reference.
    c = jnp.float32(0.7978845608028654)   # sqrt(2/pi)
    return 0.5 * x * (1.0 + jnp.tanh(c * (x + 0.044715 * x * x * x)))


# ----------------------------- fused Pallas kernel -----------------------------

def _philoberta_kernel(
    # inputs
    emb_ref,      # (B*S, H)  f32   embeddings (word+pos+type), pre-LayerNorm
    mask_ref,     # (B*S, B*S) f32  additive block-diagonal + key-padding mask
    vecs_ref,     # (R, 3H)   f32   all biases / LayerNorm params, one per row
    wqkv_ref,     # (L, H, 3H) bf16 fused [Wq*scale | Wk | Wv]
    wo_ref,       # (L, H, H) bf16  attention output projection
    w1_ref,       # (L, H, I) bf16  FFN in
    w2_ref,       # (L, I, H) bf16  FFN out
    pw_ref,       # (H, H)    bf16  temporal_proj weight
    # output
    out_ref,      # (B, H)    f32   temporal_proj(CLS)
    *, num_layers, num_heads, batch, seq, hidden, inter, eps):
    f32 = jnp.float32
    bf16 = jnp.bfloat16
    H = hidden
    Dh = H // num_heads

    def vec(row, width):
        return vecs_ref[row:row + 1, 0:width]          # (1, width) f32

    # Embedding LayerNorm.
    x = _layernorm(emb_ref[...], vec(0, H), vec(1, H), eps)   # (B*S, H) f32
    mask = mask_ref[...]                                      # (B*S, B*S) f32

    for l in range(num_layers):
        base = 3 + 8 * l
        residual = x

        # ---- multi-head self-attention (all batches at once) ----
        xb = x.astype(bf16)
        qkv = jnp.dot(xb, wqkv_ref[l], preferred_element_type=f32) + vec(base, 3 * H)
        ctxs = []
        for h in range(num_heads):
            q = qkv[:, h * Dh:(h + 1) * Dh].astype(bf16)               # scale folded in
            k = qkv[:, H + h * Dh:H + (h + 1) * Dh].astype(bf16)
            v = qkv[:, 2 * H + h * Dh:2 * H + (h + 1) * Dh].astype(bf16)
            scores = jax.lax.dot_general(
                q, k, (((1,), (1,)), ((), ())),
                preferred_element_type=f32) + mask                     # (B*S, B*S)
            m = jnp.max(scores, axis=-1, keepdims=True)
            p = jnp.exp(scores - m)
            denom = jnp.sum(p, axis=-1, keepdims=True)
            attn = p * pl.reciprocal(denom, approx=True)
            ctxs.append(jnp.dot(attn.astype(bf16), v, preferred_element_type=f32))
        ctx = jnp.concatenate(ctxs, axis=-1).astype(bf16)              # (B*S, H)
        attn_out = jnp.dot(ctx, wo_ref[l], preferred_element_type=f32) + vec(base + 1, H)
        x = _layernorm(attn_out + residual, vec(base + 2, H), vec(base + 3, H), eps)

        # ---- feed-forward ----
        residual = x
        h1 = jnp.dot(x.astype(bf16), w1_ref[l], preferred_element_type=f32) + vec(base + 4, inter)
        h1 = _gelu_tanh(h1)
        h2 = jnp.dot(h1.astype(bf16), w2_ref[l], preferred_element_type=f32) + vec(base + 5, H)
        x = _layernorm(h2 + residual, vec(base + 6, H), vec(base + 7, H), eps)

    # ---- CLS selection + temporal projection (only B rows projected) ----
    cls = jnp.concatenate([x[b * seq:b * seq + 1, :] for b in range(batch)], axis=0)
    out = jnp.dot(cls.astype(bf16), pw_ref[...], preferred_element_type=f32) + vec(2, H)
    out_ref[...] = out.astype(out_ref.dtype)


# ----------------------------- model config / params -----------------------------

class Config:
    vocab_size = 97
    max_position = 16
    type_vocab = 2
    hidden = 64
    num_heads = 2
    head_dim = 32           # hidden // num_heads
    intermediate = 128
    num_layers = 2
    ln_eps = 1e-12


def init_params(key, cfg):
    def nrm(k, shape):
        return (0.02 * jax.random.normal(k, shape)).astype(jnp.float32)

    keys = jax.random.split(key, 64)
    ki = iter(keys)
    p = {
        "word_emb": nrm(next(ki), (cfg.vocab_size, cfg.hidden)),
        "pos_emb": nrm(next(ki), (cfg.max_position, cfg.hidden)),
        "type_emb": nrm(next(ki), (cfg.type_vocab, cfg.hidden)),
        "emb_ln_g": jnp.ones((cfg.hidden,), jnp.float32),
        "emb_ln_b": jnp.zeros((cfg.hidden,), jnp.float32),
        "layers": [],
        # temporal_proj: nn.Linear(hidden, hidden)
        "proj_w": nrm(next(ki), (cfg.hidden, cfg.hidden)),
        "proj_b": jnp.zeros((cfg.hidden,), jnp.float32),
    }
    for _ in range(cfg.num_layers):
        layer = {
            "wq": nrm(next(ki), (cfg.hidden, cfg.hidden)),
            "bq": jnp.zeros((cfg.hidden,), jnp.float32),
            "wk": nrm(next(ki), (cfg.hidden, cfg.hidden)),
            "bk": jnp.zeros((cfg.hidden,), jnp.float32),
            "wv": nrm(next(ki), (cfg.hidden, cfg.hidden)),
            "bv": jnp.zeros((cfg.hidden,), jnp.float32),
            "wo": nrm(next(ki), (cfg.hidden, cfg.hidden)),
            "bo": jnp.zeros((cfg.hidden,), jnp.float32),
            "ln1_g": jnp.ones((cfg.hidden,), jnp.float32),
            "ln1_b": jnp.zeros((cfg.hidden,), jnp.float32),
            "w1": nrm(next(ki), (cfg.hidden, cfg.intermediate)),
            "b1": jnp.zeros((cfg.intermediate,), jnp.float32),
            "w2": nrm(next(ki), (cfg.intermediate, cfg.hidden)),
            "b2": jnp.zeros((cfg.hidden,), jnp.float32),
            "ln2_g": jnp.ones((cfg.hidden,), jnp.float32),
            "ln2_b": jnp.zeros((cfg.hidden,), jnp.float32),
        }
        p["layers"].append(layer)
    return p


def pack_params(params, cfg):
    """One-time (outside the jitted hot path) weight packing for the fused kernel.

    - wqkv: per-layer [Wq*scale | Wk | Wv] concat, bf16, (L, H, 3H)
    - wo/w1/w2/pw: bf16 matmul weights stacked per layer
    - vecs: every bias / LayerNorm vector as one f32 row padded to width 3H
    """
    H, I, L = cfg.hidden, cfg.intermediate, cfg.num_layers
    scale = 1.0 / math.sqrt(cfg.head_dim)
    VW = 3 * H                                   # widest row (>= intermediate)
    bf16 = jnp.bfloat16

    def pad_row(v):
        v = jnp.asarray(v, jnp.float32).reshape(-1)
        return jnp.pad(v, (0, VW - v.shape[0]))

    rows = [pad_row(params["emb_ln_g"]),         # row 0
            pad_row(params["emb_ln_b"]),         # row 1
            pad_row(params["proj_b"])]           # row 2
    wqkv, wo, w1, w2 = [], [], [], []
    for l in params["layers"]:
        wqkv.append(jnp.concatenate([l["wq"] * scale, l["wk"], l["wv"]], axis=1))
        wo.append(l["wo"])
        w1.append(l["w1"])
        w2.append(l["w2"])
        rows.append(pad_row(jnp.concatenate([l["bq"] * scale, l["bk"], l["bv"]])))
        rows.append(pad_row(l["bo"]))
        rows.append(pad_row(l["ln1_g"]))
        rows.append(pad_row(l["ln1_b"]))
        rows.append(pad_row(l["b1"]))
        rows.append(pad_row(l["b2"]))
        rows.append(pad_row(l["ln2_g"]))
        rows.append(pad_row(l["ln2_b"]))

    packed = {
        "word_emb": params["word_emb"],
        "pos_emb": params["pos_emb"],
        "type_row": params["type_emb"][0][None, None, :],   # token_type_ids == 0
        "vecs": jnp.stack(rows),                            # (3 + 8L, 3H) f32
        "wqkv": jnp.stack(wqkv).astype(bf16),                # (L, H, 3H)
        "wo": jnp.stack(wo).astype(bf16),                    # (L, H, H)
        "w1": jnp.stack(w1).astype(bf16),                    # (L, H, I)
        "w2": jnp.stack(w2).astype(bf16),                    # (L, I, H)
        "pw": params["proj_w"].astype(bf16),                 # (H, H)
    }
    return jax.device_put(packed)


# ----------------------------- forward (wrapper) -----------------------------

def philoberta_forward(packed, input_ids, attention_mask, cfg):
    B, S = input_ids.shape
    H = cfg.hidden

    # TODO(synk): embedding-table gathers stay in JAX (jnp.take); a Pallas
    # DMA-gather kernel is not worthwhile at this scale.
    word = jnp.take(packed["word_emb"], input_ids, axis=0)        # (B, S, H)
    pos = packed["pos_emb"][:S][None, :, :]                       # (1, S, H)
    emb2d = (word + pos + packed["type_row"]).reshape(B * S, H).astype(jnp.float32)

    # Block-diagonal (per-batch) + key-padding additive mask over all B*S rows.
    key_valid = attention_mask.reshape(-1).astype(jnp.float32)    # (B*S,)
    batch_ids = jnp.repeat(jnp.arange(B), S)
    same_batch = batch_ids[:, None] == batch_ids[None, :]
    allowed = jnp.where(same_batch, key_valid[None, :], 0.0)
    add_mask = (1.0 - allowed) * jnp.float32(-1e9)                # (B*S, B*S)

    kern = functools.partial(
        _philoberta_kernel,
        num_layers=cfg.num_layers, num_heads=cfg.num_heads,
        batch=B, seq=S, hidden=H, inter=cfg.intermediate, eps=cfg.ln_eps)

    inputs = (emb2d, add_mask, packed["vecs"], packed["wqkv"], packed["wo"],
              packed["w1"], packed["w2"], packed["pw"])
    vmem = pl.BlockSpec(memory_space=pltpu.MemorySpace.VMEM)
    return pl.pallas_call(
        kern,
        out_shape=jax.ShapeDtypeStruct((B, H), jnp.float32),
        in_specs=[vmem] * len(inputs),
        out_specs=vmem,
    )(*inputs)


# ----------------------------- main -----------------------------

if __name__ == "__main__":
    cfg = Config()
    B, S = 2, 8

    key = jax.random.PRNGKey(0)
    kp, kid = jax.random.split(key)
    params = init_params(kp, cfg)

    # Pack weights ONCE, outside the jitted hot path.
    packed = pack_params(params, cfg)

    input_ids = jax.random.randint(kid, (B, S), 0, cfg.vocab_size, dtype=jnp.int32)
    attention_mask = jnp.concatenate(
        [jnp.ones((B, S - 2), jnp.int32), jnp.zeros((B, 2), jnp.int32)], axis=1)

    fwd = jax.jit(functools.partial(philoberta_forward, cfg=cfg))
    out = fwd(packed, input_ids, attention_mask)
    out = jax.block_until_ready(out)
    assert out.shape == (B, cfg.hidden)
    assert bool(jnp.all(jnp.isfinite(out)))
    print("KERNEL_OK")
</pallas_src>

<mosaic_0001>
module attributes {stable_mosaic.version = 11 : i64} {
  func.func @_philoberta_kernel(%arg0: memref<16x64xf32, #tpu.memory_space<vmem>>, %arg1: memref<16x16xf32, #tpu.memory_space<vmem>>, %arg2: memref<19x192xf32, #tpu.memory_space<vmem>>, %arg3: memref<2x64x192xbf16, #tpu.memory_space<vmem>>, %arg4: memref<2x64x64xbf16, #tpu.memory_space<vmem>>, %arg5: memref<2x64x128xbf16, #tpu.memory_space<vmem>>, %arg6: memref<2x128x64xbf16, #tpu.memory_space<vmem>>, %arg7: memref<64x64xbf16, #tpu.memory_space<vmem>>, %arg8: memref<2x64xf32, #tpu.memory_space<vmem>>) attributes {dimension_semantics = [], scalar_prefetch = 0 : i64, scratch_operands = 0 : i64, tpu.core_type = #tpu.core_type<tc>} {
    %c0 = arith.constant 0 : index
    %c0_0 = arith.constant 0 : index
    %0 = vector.load %arg0[%c0, %c0_0] : memref<16x64xf32, #tpu.memory_space<vmem>>, vector<16x64xf32>
    %c0_1 = arith.constant 0 : index
    %c0_2 = arith.constant 0 : index
    %1 = vector.load %arg2[%c0_1, %c0_2] : memref<19x192xf32, #tpu.memory_space<vmem>>, vector<1x64xf32>
    %c1 = arith.constant 1 : index
    %c0_3 = arith.constant 0 : index
    %2 = vector.load %arg2[%c1, %c0_3] : memref<19x192xf32, #tpu.memory_space<vmem>>, vector<1x64xf32>
    %cst = arith.constant dense<0.000000e+00> : vector<16xf32>
    %3 = vector.multi_reduction <add>, %0, %cst [1] : vector<16x64xf32> to vector<16xf32>
    %4 = vector.shape_cast %3 : vector<16xf32> to vector<16x1xf32>
    %cst_4 = arith.constant 6.400000e+01 : f32
    %5 = vector.broadcast %cst_4 : f32 to vector<16x1xf32>
    %6 = arith.divf %4, %5 : vector<16x1xf32>
    %7 = vector.broadcast %6 : vector<16x1xf32> to vector<16x64xf32>
    %8 = arith.subf %0, %7 : vector<16x64xf32>
    %9 = arith.mulf %8, %8 : vector<16x64xf32>
    %cst_5 = arith.constant dense<0.000000e+00> : vector<16xf32>
    %10 = vector.multi_reduction <add>, %9, %cst_5 [1] : vector<16x64xf32> to vector<16xf32>
    %11 = vector.shape_cast %10 : vector<16xf32> to vector<16x1xf32>
    %cst_6 = arith.constant 6.400000e+01 : f32
    %12 = vector.broadcast %cst_6 : f32 to vector<16x1xf32>
    %13 = arith.divf %11, %12 : vector<16x1xf32>
    %14 = vector.broadcast %6 : vector<16x1xf32> to vector<16x64xf32>
    %15 = arith.subf %0, %14 : vector<16x64xf32>
    %cst_7 = arith.constant 9.99999996E-13 : f32
    %16 = vector.broadcast %cst_7 : f32 to vector<16x1xf32>
    %17 = arith.addf %13, %16 : vector<16x1xf32>
    %18 = math.rsqrt %17 : vector<16x1xf32>
    %19 = vector.broadcast %18 : vector<16x1xf32> to vector<16x64xf32>
    %20 = arith.mulf %15, %19 : vector<16x64xf32>
    %21 = vector.broadcast %1 : vector<1x64xf32> to vector<16x64xf32>
    %22 = arith.mulf %20, %21 : vector<16x64xf32>
    %23 = vector.broadcast %2 : vector<1x64xf32> to vector<16x64xf32>
    %24 = arith.addf %22, %23 : vector<16x64xf32>
    %c0_8 = arith.constant 0 : index
    %c0_9 = arith.constant 0 : index
    %25 = vector.load %arg1[%c0_8, %c0_9] : memref<16x16xf32, #tpu.memory_space<vmem>>, vector<16x16xf32>
    %26 = arith.truncf %24 : vector<16x64xf32> to vector<16x64xbf16>
    %c0_10 = arith.constant 0 : index
    %c0_11 = arith.constant 0 : index
    %c0_12 = arith.constant 0 : index
    %27 = vector.load %arg3[%c0_10, %c0_11, %c0_12] : memref<2x64x192xbf16, #tpu.memory_space<vmem>>, vector<1x64x192xbf16>
    %28 = vector.shape_cast %27 : vector<1x64x192xbf16> to vector<64x192xbf16>
    %cst_13 = arith.constant dense<0.000000e+00> : vector<16x192xf32>
    %29 = tpu.matmul %26, %28, %cst_13 {dimension_numbers = #tpu.dot_dimension_numbers<[1], [0], [0], [1], [0, 0, 1, 1], [], []>} : vector<16x64xbf16>, vector<64x192xbf16>, vector<16x192xf32> -> vector<16x192xf32>
    %c3 = arith.constant 3 : index
    %c0_14 = arith.constant 0 : index
    %30 = vector.load %arg2[%c3, %c0_14] : memref<19x192xf32, #tpu.memory_space<vmem>>, vector<1x192xf32>
    %31 = vector.broadcast %30 : vector<1x192xf32> to vector<16x192xf32>
    %32 = arith.addf %29, %31 : vector<16x192xf32>
    %33 = vector.extract_strided_slice %32 {offsets = [0, 0], sizes = [16, 32], strides = [1, 1]} : vector<16x192xf32> to vector<16x32xf32>
    %34 = arith.truncf %33 : vector<16x32xf32> to vector<16x32xbf16>
    %35 = vector.extract_strided_slice %32 {offsets = [0, 64], sizes = [16, 32], strides = [1, 1]} : vector<16x192xf32> to vector<16x32xf32>
    %36 = arith.truncf %35 : vector<16x32xf32> to vector<16x32xbf16>
    %37 = vector.extract_strided_slice %32 {offsets = [0, 128], sizes = [16, 32], strides = [1, 1]} : vector<16x192xf32> to vector<16x32xf32>
    %38 = arith.truncf %37 : vector<16x32xf32> to vector<16x32xbf16>
    %cst_15 = arith.constant dense<0.000000e+00> : vector<16x16xf32>
    %39 = tpu.matmul %34, %36, %cst_15 {dimension_numbers = #tpu.dot_dimension_numbers<[1], [1], [0], [0], [0, 0, 1, 0], [], []>} : vector<16x32xbf16>, vector<16x32xbf16>, vector<16x16xf32> -> vector<16x16xf32>
    %40 = arith.addf %39, %25 : vector<16x16xf32>
    %cst_16 = arith.constant dense<0xFF800000> : vector<16xf32>
    %41 = vector.multi_reduction <maximumf>, %40, %cst_16 [1] : vector<16x16xf32> to vector<16xf32>
    %42 = vector.shape_cast %41 : vector<16xf32> to vector<16x1xf32>
    %43 = vector.broadcast %42 : vector<16x1xf32> to vector<16x16xf32>
    %44 = arith.subf %40, %43 : vector<16x16xf32>
    %45 = math.exp %44 : vector<16x16xf32>
    %cst_17 = arith.constant dense<0.000000e+00> : vector<16xf32>
    %46 = vector.multi_reduction <add>, %45, %cst_17 [1] : vector<16x16xf32> to vector<16xf32>
    %47 = vector.shape_cast %46 : vector<16xf32> to vector<16x1xf32>
    %48 = tpu.reciprocal %47 {approx = true} : vector<16x1xf32> -> vector<16x1xf32>
    %49 = vector.broadcast %48 : vector<16x1xf32> to vector<16x16xf32>
    %50 = arith.mulf %45, %49 : vector<16x16xf32>
    %51 = arith.truncf %50 : vector<16x16xf32> to vector<16x16xbf16>
    %cst_18 = arith.constant dense<0.000000e+00> : vector<16x32xf32>
    %52 = tpu.matmul %51, %38, %cst_18 {dimension_numbers = #tpu.dot_dimension_numbers<[1], [0], [0], [1], [0, 0, 1, 1], [], []>} : vector<16x16xbf16>, vector<16x32xbf16>, vector<16x32xf32> -> vector<16x32xf32>
    %53 = vector.extract_strided_slice %32 {offsets = [0, 32], sizes = [16, 32], strides = [1, 1]} : vector<16x192xf32> to vector<16x32xf32>
    %54 = arith.truncf %53 : vector<16x32xf32> to vector<16x32xbf16>
    %55 = vector.extract_strided_slice %32 {offsets = [0, 96], sizes = [16, 32], strides = [1, 1]} : vector<16x192xf32> to vector<16x32xf32>
    %56 = arith.truncf %55 : vector<16x32xf32> to vector<16x32xbf16>
    %57 = vector.extract_strided_slice %32 {offsets = [0, 160], sizes = [16, 32], strides = [1, 1]} : vector<16x192xf32> to vector<16x32xf32>
    %58 = arith.truncf %57 : vector<16x32xf32> to vector<16x32xbf16>
    %cst_19 = arith.constant dense<0.000000e+00> : vector<16x16xf32>
    %59 = tpu.matmul %54, %56, %cst_19 {dimension_numbers = #tpu.dot_dimension_numbers<[1], [1], [0], [0], [0, 0, 1, 0], [], []>} : vector<16x32xbf16>, vector<16x32xbf16>, vector<16x16xf32> -> vector<16x16xf32>
    %60 = arith.addf %59, %25 : vector<16x16xf32>
    %cst_20 = arith.constant dense<0xFF800000> : vector<16xf32>
    %61 = vector.multi_reduction <maximumf>, %60, %cst_20 [1] : vector<16x16xf32> to vector<16xf32>
    %62 = vector.shape_cast %61 : vector<16xf32> to vector<16x1xf32>
    %63 = vector.broadcast %62 : vector<16x1xf32> to vector<16x16xf32>
    %64 = arith.subf %60, %63 : vector<16x16xf32>
    %65 = math.exp %64 : vector<16x16xf32>
    %cst_21 = arith.constant dense<0.000000e+00> : vector<16xf32>
    %66 = vector.multi_reduction <add>, %65, %cst_21 [1] : vector<16x16xf32> to vector<16xf32>
    %67 = vector.shape_cast %66 : vector<16xf32> to vector<16x1xf32>
    %68 = tpu.reciprocal %67 {approx = true} : vector<16x1xf32> -> vector<16x1xf32>
    %69 = vector.broadcast %68 : vector<16x1xf32> to vector<16x16xf32>
    %70 = arith.mulf %65, %69 : vector<16x16xf32>
    %71 = arith.truncf %70 : vector<16x16xf32> to vector<16x16xbf16>
    %cst_22 = arith.constant dense<0.000000e+00> : vector<16x32xf32>
    %72 = tpu.matmul %71, %58, %cst_22 {dimension_numbers = #tpu.dot_dimension_numbers<[1], [0], [0], [1], [0, 0, 1, 1], [], []>} : vector<16x16xbf16>, vector<16x32xbf16>, vector<16x32xf32> -> vector<16x32xf32>
    %73 = tpu.concatenate %52, %72 in 1 : vector<16x32xf32>, vector<16x32xf32> -> vector<16x64xf32>
    %74 = arith.truncf %73 : vector<16x64xf32> to vector<16x64xbf16>
    %c0_23 = arith.constant 0 : index
    %c0_24 = arith.constant 0 : index
    %c0_25 = arith.constant 0 : index
    %75 = vector.load %arg4[%c0_23, %c0_24, %c0_25] : memref<2x64x64xbf16, #tpu.memory_space<vmem>>, vector<1x64x64xbf16>
    %76 = vector.shape_cast %75 : vector<1x64x64xbf16> to vector<64x64xbf16>
    %cst_26 = arith.constant dense<0.000000e+00> : vector<16x64xf32>
    %77 = tpu.matmul %74, %76, %cst_26 {dimension_numbers = #tpu.dot_dimension_numbers<[1], [0], [0], [1], [0, 0, 1, 1], [], []>} : vector<16x64xbf16>, vector<64x64xbf16>, vector<16x64xf32> -> vector<16x64xf32>
    %c4 = arith.constant 4 : index
    %c0_27 = arith.constant 0 : index
    %78 = vector.load %arg2[%c4, %c0_27] : memref<19x192xf32, #tpu.memory_space<vmem>>, vector<1x64xf32>
    %79 = vector.broadcast %78 : vector<1x64xf32> to vector<16x64xf32>
    %80 = arith.addf %77, %79 : vector<16x64xf32>
    %81 = arith.addf %80, %24 : vector<16x64xf32>
    %c5 = arith.constant 5 : index
    %c0_28 = arith.constant 0 : index
    %82 = vector.load %arg2[%c5, %c0_28] : memref<19x192xf32, #tpu.memory_space<vmem>>, vector<1x64xf32>
    %c6 = arith.constant 6 : index
    %c0_29 = arith.constant 0 : index
    %83 = vector.load %arg2[%c6, %c0_29] : memref<19x192xf32, #tpu.memory_space<vmem>>, vector<1x64xf32>
    %cst_30 = arith.constant dense<0.000000e+00> : vector<16xf32>
    %84 = vector.multi_reduction <add>, %81, %cst_30 [1] : vector<16x64xf32> to vector<16xf32>
    %85 = vector.shape_cast %84 : vector<16xf32> to vector<16x1xf32>
    %cst_31 = arith.constant 6.400000e+01 : f32
    %86 = vector.broadcast %cst_31 : f32 to vector<16x1xf32>
    %87 = arith.divf %85, %86 : vector<16x1xf32>
    %88 = vector.broadcast %87 : vector<16x1xf32> to vector<16x64xf32>
    %89 = arith.subf %81, %88 : vector<16x64xf32>
    %90 = arith.mulf %89, %89 : vector<16x64xf32>
    %cst_32 = arith.constant dense<0.000000e+00> : vector<16xf32>
    %91 = vector.multi_reduction <add>, %90, %cst_32 [1] : vector<16x64xf32> to vector<16xf32>
    %92 = vector.shape_cast %91 : vector<16xf32> to vector<16x1xf32>
    %cst_33 = arith.constant 6.400000e+01 : f32
    %93 = vector.broadcast %cst_33 : f32 to vector<16x1xf32>
    %94 = arith.divf %92, %93 : vector<16x1xf32>
    %95 = vector.broadcast %87 : vector<16x1xf32> to vector<16x64xf32>
    %96 = arith.subf %81, %95 : vector<16x64xf32>
    %cst_34 = arith.constant 9.99999996E-13 : f32
    %97 = vector.broadcast %cst_34 : f32 to vector<16x1xf32>
    %98 = arith.addf %94, %97 : vector<16x1xf32>
    %99 = math.rsqrt %98 : vector<16x1xf32>
    %100 = vector.broadcast %99 : vector<16x1xf32> to vector<16x64xf32>
    %101 = arith.mulf %96, %100 : vector<16x64xf32>
    %102 = vector.broadcast %82 : vector<1x64xf32> to vector<16x64xf32>
    %103 = arith.mulf %101, %102 : vector<16x64xf32>
    %104 = vector.broadcast %83 : vector<1x64xf32> to vector<16x64xf32>
    %105 = arith.addf %103, %104 : vector<16x64xf32>
    %106 = arith.truncf %105 : vector<16x64xf32> to vector<16x64xbf16>
    %c0_35 = arith.constant 0 : index
    %c0_36 = arith.constant 0 : index
    %c0_37 = arith.constant 0 : index
    %107 = vector.load %arg5[%c0_35, %c0_36, %c0_37] : memref<2x64x128xbf16, #tpu.memory_space<vmem>>, vector<1x64x128xbf16>
    %108 = vector.shape_cast %107 : vector<1x64x128xbf16> to vector<64x128xbf16>
    %cst_38 = arith.constant dense<0.000000e+00> : vector<16x128xf32>
    %109 = tpu.matmul %106, %108, %cst_38 {dimension_numbers = #tpu.dot_dimension_numbers<[1], [0], [0], [1], [0, 0, 1, 1], [], []>} : vector<16x64xbf16>, vector<64x128xbf16>, vector<16x128xf32> -> vector<16x128xf32>
    %c7 = arith.constant 7 : index
    %c0_39 = arith.constant 0 : index
    %110 = vector.load %arg2[%c7, %c0_39] : memref<19x192xf32, #tpu.memory_space<vmem>>, vector<1x128xf32>
    %111 = vector.broadcast %110 : vector<1x128xf32> to vector<16x128xf32>
    %112 = arith.addf %109, %111 : vector<16x128xf32>
    %cst_40 = arith.constant 5.000000e-01 : f32
    %113 = vector.broadcast %cst_40 : f32 to vector<16x128xf32>
    %114 = arith.mulf %113, %112 : vector<16x128xf32>
    %cst_41 = arith.constant 4.471500e-02 : f32
    %115 = vector.broadcast %cst_41 : f32 to vector<16x128xf32>
    %116 = arith.mulf %115, %112 : vector<16x128xf32>
    %117 = arith.mulf %116, %112 : vector<16x128xf32>
    %118 = arith.mulf %117, %112 : vector<16x128xf32>
    %119 = arith.addf %112, %118 : vector<16x128xf32>
    %cst_42 = arith.constant 0.797884583 : f32
    %120 = vector.broadcast %cst_42 : f32 to vector<16x128xf32>
    %121 = arith.mulf %120, %119 : vector<16x128xf32>
    %122 = math.tanh %121 : vector<16x128xf32>
    %cst_43 = arith.constant 1.000000e+00 : f32
    %123 = vector.broadcast %cst_43 : f32 to vector<16x128xf32>
    %124 = arith.addf %123, %122 : vector<16x128xf32>
    %125 = arith.mulf %114, %124 : vector<16x128xf32>
    %126 = arith.truncf %125 : vector<16x128xf32> to vector<16x128xbf16>
    %c0_44 = arith.constant 0 : index
    %c0_45 = arith.constant 0 : index
    %c0_46 = arith.constant 0 : index
    %127 = vector.load %arg6[%c0_44, %c0_45, %c0_46] : memref<2x128x64xbf16, #tpu.memory_space<vmem>>, vector<1x128x64xbf16>
    %128 = vector.shape_cast %127 : vector<1x128x64xbf16> to vector<128x64xbf16>
    %cst_47 = arith.constant dense<0.000000e+00> : vector<16x64xf32>
    %129 = tpu.matmul %126, %128, %cst_47 {dimension_numbers = #tpu.dot_dimension_numbers<[1], [0], [0], [1], [0, 0, 1, 1], [], []>} : vector<16x128xbf16>, vector<128x64xbf16>, vector<16x64xf32> -> vector<16x64xf32>
    %c8 = arith.constant 8 : index
    %c0_48 = arith.constant 0 : index
    %130 = vector.load %arg2[%c8, %c0_48] : memref<19x192xf32, #tpu.memory_space<vmem>>, vector<1x64xf32>
    %131 = vector.broadcast %130 : vector<1x64xf32> to vector<16x64xf32>
    %132 = arith.addf %129, %131 : vector<16x64xf32>
    %133 = arith.addf %132, %105 : vector<16x64xf32>
    %c9 = arith.constant 9 : index
    %c0_49 = arith.constant 0 : index
    %134 = vector.load %arg2[%c9, %c0_49] : memref<19x192xf32, #tpu.memory_space<vmem>>, vector<1x64xf32>
    %c10 = arith.constant 10 : index
    %c0_50 = arith.constant 0 : index
    %135 = vector.load %arg2[%c10, %c0_50] : memref<19x192xf32, #tpu.memory_space<vmem>>, vector<1x64xf32>
    %cst_51 = arith.constant dense<0.000000e+00> : vector<16xf32>
    %136 = vector.multi_reduction <add>, %133, %cst_51 [1] : vector<16x64xf32> to vector<16xf32>
    %137 = vector.shape_cast %136 : vector<16xf32> to vector<16x1xf32>
    %cst_52 = arith.constant 6.400000e+01 : f32
    %138 = vector.broadcast %cst_52 : f32 to vector<16x1xf32>
    %139 = arith.divf %137, %138 : vector<16x1xf32>
    %140 = vector.broadcast %139 : vector<16x1xf32> to vector<16x64xf32>
    %141 = arith.subf %133, %140 : vector<16x64xf32>
    %142 = arith.mulf %141, %141 : vector<16x64xf32>
    %cst_53 = arith.constant dense<0.000000e+00> : vector<16xf32>
    %143 = vector.multi_reduction <add>, %142, %cst_53 [1] : vector<16x64xf32> to vector<16xf32>
    %144 = vector.shape_cast %143 : vector<16xf32> to vector<16x1xf32>
    %cst_54 = arith.constant 6.400000e+01 : f32
    %145 = vector.broadcast %cst_54 : f32 to vector<16x1xf32>
    %146 = arith.divf %144, %145 : vector<16x1xf32>
    %147 = vector.broadcast %139 : vector<16x1xf32> to vector<16x64xf32>
    %148 = arith.subf %133, %147 : vector<16x64xf32>
    %cst_55 = arith.constant 9.99999996E-13 : f32
    %149 = vector.broadcast %cst_55 : f32 to vector<16x1xf32>
    %150 = arith.addf %146, %149 : vector<16x1xf32>
    %151 = math.rsqrt %150 : vector<16x1xf32>
    %152 = vector.broadcast %151 : vector<16x1xf32> to vector<16x64xf32>
    %153 = arith.mulf %148, %152 : vector<16x64xf32>
    %154 = vector.broadcast %134 : vector<1x64xf32> to vector<16x64xf32>
    %155 = arith.mulf %153, %154 : vector<16x64xf32>
    %156 = vector.broadcast %135 : vector<1x64xf32> to vector<16x64xf32>
    %157 = arith.addf %155, %156 : vector<16x64xf32>
    %158 = arith.truncf %157 : vector<16x64xf32> to vector<16x64xbf16>
    %c1_56 = arith.constant 1 : index
    %c0_57 = arith.constant 0 : index
    %c0_58 = arith.constant 0 : index
    %159 = vector.load %arg3[%c1_56, %c0_57, %c0_58] : memref<2x64x192xbf16, #tpu.memory_space<vmem>>, vector<1x64x192xbf16>
    %160 = vector.shape_cast %159 : vector<1x64x192xbf16> to vector<64x192xbf16>
    %cst_59 = arith.constant dense<0.000000e+00> : vector<16x192xf32>
    %161 = tpu.matmul %158, %160, %cst_59 {dimension_numbers = #tpu.dot_dimension_numbers<[1], [0], [0], [1], [0, 0, 1, 1], [], []>} : vector<16x64xbf16>, vector<64x192xbf16>, vector<16x192xf32> -> vector<16x192xf32>
    %c11 = arith.constant 11 : index
    %c0_60 = arith.constant 0 : index
    %162 = vector.load %arg2[%c11, %c0_60] : memref<19x192xf32, #tpu.memory_space<vmem>>, vector<1x192xf32>
    %163 = vector.broadcast %162 : vector<1x192xf32> to vector<16x192xf32>
    %164 = arith.addf %161, %163 : vector<16x192xf32>
    %165 = vector.extract_strided_slice %164 {offsets = [0, 0], sizes = [16, 32], strides = [1, 1]} : vector<16x192xf32> to vector<16x32xf32>
    %166 = arith.truncf %165 : vector<16x32xf32> to vector<16x32xbf16>
    %167 = vector.extract_strided_slice %164 {offsets = [0, 64], sizes = [16, 32], strides = [1, 1]} : vector<16x192xf32> to vector<16x32xf32>
    %168 = arith.truncf %167 : vector<16x32xf32> to vector<16x32xbf16>
    %169 = vector.extract_strided_slice %164 {offsets = [0, 128], sizes = [16, 32], strides = [1, 1]} : vector<16x192xf32> to vector<16x32xf32>
    %170 = arith.truncf %169 : vector<16x32xf32> to vector<16x32xbf16>
    %cst_61 = arith.constant dense<0.000000e+00> : vector<16x16xf32>
    %171 = tpu.matmul %166, %168, %cst_61 {dimension_numbers = #tpu.dot_dimension_numbers<[1], [1], [0], [0], [0, 0, 1, 0], [], []>} : vector<16x32xbf16>, vector<16x32xbf16>, vector<16x16xf32> -> vector<16x16xf32>
    %172 = arith.addf %171, %25 : vector<16x16xf32>
    %cst_62 = arith.constant dense<0xFF800000> : vector<16xf32>
    %173 = vector.multi_reduction <maximumf>, %172, %cst_62 [1] : vector<16x16xf32> to vector<16xf32>
    %174 = vector.shape_cast %173 : vector<16xf32> to vector<16x1xf32>
    %175 = vector.broadcast %174 : vector<16x1xf32> to vector<16x16xf32>
    %176 = arith.subf %172, %175 : vector<16x16xf32>
    %177 = math.exp %176 : vector<16x16xf32>
    %cst_63 = arith.constant dense<0.000000e+00> : vector<16xf32>
    %178 = vector.multi_reduction <add>, %177, %cst_63 [1] : vector<16x16xf32> to vector<16xf32>
    %179 = vector.shape_cast %178 : vector<16xf32> to vector<16x1xf32>
    %180 = tpu.reciprocal %179 {approx = true} : vector<16x1xf32> -> vector<16x1xf32>
    %181 = vector.broadcast %180 : vector<16x1xf32> to vector<16x16xf32>
    %182 = arith.mulf %177, %181 : vector<16x16xf32>
    %183 = arith.truncf %182 : vector<16x16xf32> to vector<16x16xbf16>
    %cst_64 = arith.constant dense<0.000000e+00> : vector<16x32xf32>
    %184 = tpu.matmul %183, %170, %cst_64 {dimension_numbers = #tpu.dot_dimension_numbers<[1], [0], [0], [1], [0, 0, 1, 1], [], []>} : vector<16x16xbf16>, vector<16x32xbf16>, vector<16x32xf32> -> vector<16x32xf32>
    %185 = vector.extract_strided_slice %164 {offsets = [0, 32], sizes = [16, 32], strides = [1, 1]} : vector<16x192xf32> to vector<16x32xf32>
    %186 = arith.truncf %185 : vector<16x32xf32> to vector<16x32xbf16>
    %187 = vector.extract_strided_slice %164 {offsets = [0, 96], sizes = [16, 32], strides = [1, 1]} : vector<16x192xf32> to vector<16x32xf32>
    %188 = arith.truncf %187 : vector<16x32xf32> to vector<16x32xbf16>
    %189 = vector.extract_strided_slice %164 {offsets = [0, 160], sizes = [16, 32], strides = [1, 1]} : vector<16x192xf32> to vector<16x32xf32>
    %190 = arith.truncf %189 : vector<16x32xf32> to vector<16x32xbf16>
    %cst_65 = arith.constant dense<0.000000e+00> : vector<16x16xf32>
    %191 = tpu.matmul %186, %188, %cst_65 {dimension_numbers = #tpu.dot_dimension_numbers<[1], [1], [0], [0], [0, 0, 1, 0], [], []>} : vector<16x32xbf16>, vector<16x32xbf16>, vector<16x16xf32> -> vector<16x16xf32>
    %192 = arith.addf %191, %25 : vector<16x16xf32>
    %cst_66 = arith.constant dense<0xFF800000> : vector<16xf32>
    %193 = vector.multi_reduction <maximumf>, %192, %cst_66 [1] : vector<16x16xf32> to vector<16xf32>
    %194 = vector.shape_cast %193 : vector<16xf32> to vector<16x1xf32>
    %195 = vector.broadcast %194 : vector<16x1xf32> to vector<16x16xf32>
    %196 = arith.subf %192, %195 : vector<16x16xf32>
    %197 = math.exp %196 : vector<16x16xf32>
    %cst_67 = arith.constant dense<0.000000e+00> : vector<16xf32>
    %198 = vector.multi_reduction <add>, %197, %cst_67 [1] : vector<16x16xf32> to vector<16xf32>
    %199 = vector.shape_cast %198 : vector<16xf32> to vector<16x1xf32>
    %200 = tpu.reciprocal %199 {approx = true} : vector<16x1xf32> -> vector<16x1xf32>
    %201 = vector.broadcast %200 : vector<16x1xf32> to vector<16x16xf32>
    %202 = arith.mulf %197, %201 : vector<16x16xf32>
    %203 = arith.truncf %202 : vector<16x16xf32> to vector<16x16xbf16>
    %cst_68 = arith.constant dense<0.000000e+00> : vector<16x32xf32>
    %204 = tpu.matmul %203, %190, %cst_68 {dimension_numbers = #tpu.dot_dimension_numbers<[1], [0], [0], [1], [0, 0, 1, 1], [], []>} : vector<16x16xbf16>, vector<16x32xbf16>, vector<16x32xf32> -> vector<16x32xf32>
    %205 = tpu.concatenate %184, %204 in 1 : vector<16x32xf32>, vector<16x32xf32> -> vector<16x64xf32>
    %206 = arith.truncf %205 : vector<16x64xf32> to vector<16x64xbf16>
    %c1_69 = arith.constant 1 : index
    %c0_70 = arith.constant 0 : index
    %c0_71 = arith.constant 0 : index
    %207 = vector.load %arg4[%c1_69, %c0_70, %c0_71] : memref<2x64x64xbf16, #tpu.memory_space<vmem>>, vector<1x64x64xbf16>
    %208 = vector.shape_cast %207 : vector<1x64x64xbf16> to vector<64x64xbf16>
    %cst_72 = arith.constant dense<0.000000e+00> : vector<16x64xf32>
    %209 = tpu.matmul %206, %208, %cst_72 {dimension_numbers = #tpu.dot_dimension_numbers<[1], [0], [0], [1], [0, 0, 1, 1], [], []>} : vector<16x64xbf16>, vector<64x64xbf16>, vector<16x64xf32> -> vector<16x64xf32>
    %c12 = arith.constant 12 : index
    %c0_73 = arith.constant 0 : index
    %210 = vector.load %arg2[%c12, %c0_73] : memref<19x192xf32, #tpu.memory_space<vmem>>, vector<1x64xf32>
    %211 = vector.broadcast %210 : vector<1x64xf32> to vector<16x64xf32>
    %212 = arith.addf %209, %211 : vector<16x64xf32>
    %213 = arith.addf %212, %157 : vector<16x64xf32>
    %c13 = arith.constant 13 : index
    %c0_74 = arith.constant 0 : index
    %214 = vector.load %arg2[%c13, %c0_74] : memref<19x192xf32, #tpu.memory_space<vmem>>, vector<1x64xf32>
    %c14 = arith.constant 14 : index
    %c0_75 = arith.constant 0 : index
    %215 = vector.load %arg2[%c14, %c0_75] : memref<19x192xf32, #tpu.memory_space<vmem>>, vector<1x64xf32>
    %cst_76 = arith.constant dense<0.000000e+00> : vector<16xf32>
    %216 = vector.multi_reduction <add>, %213, %cst_76 [1] : vector<16x64xf32> to vector<16xf32>
    %217 = vector.shape_cast %216 : vector<16xf32> to vector<16x1xf32>
    %cst_77 = arith.constant 6.400000e+01 : f32
    %218 = vector.broadcast %cst_77 : f32 to vector<16x1xf32>
    %219 = arith.divf %217, %218 : vector<16x1xf32>
    %220 = vector.broadcast %219 : vector<16x1xf32> to vector<16x64xf32>
    %221 = arith.subf %213, %220 : vector<16x64xf32>
    %222 = arith.mulf %221, %221 : vector<16x64xf32>
    %cst_78 = arith.constant dense<0.000000e+00> : vector<16xf32>
    %223 = vector.multi_reduction <add>, %222, %cst_78 [1] : vector<16x64xf32> to vector<16xf32>
    %224 = vector.shape_cast %223 : vector<16xf32> to vector<16x1xf32>
    %cst_79 = arith.constant 6.400000e+01 : f32
    %225 = vector.broadcast %cst_79 : f32 to vector<16x1xf32>
    %226 = arith.divf %224, %225 : vector<16x1xf32>
    %227 = vector.broadcast %219 : vector<16x1xf32> to vector<16x64xf32>
    %228 = arith.subf %213, %227 : vector<16x64xf32>
    %cst_80 = arith.constant 9.99999996E-13 : f32
    %229 = vector.broadcast %cst_80 : f32 to vector<16x1xf32>
    %230 = arith.addf %226, %229 : vector<16x1xf32>
    %231 = math.rsqrt %230 : vector<16x1xf32>
    %232 = vector.broadcast %231 : vector<16x1xf32> to vector<16x64xf32>
    %233 = arith.mulf %228, %232 : vector<16x64xf32>
    %234 = vector.broadcast %214 : vector<1x64xf32> to vector<16x64xf32>
    %235 = arith.mulf %233, %234 : vector<16x64xf32>
    %236 = vector.broadcast %215 : vector<1x64xf32> to vector<16x64xf32>
    %237 = arith.addf %235, %236 : vector<16x64xf32>
    %238 = arith.truncf %237 : vector<16x64xf32> to vector<16x64xbf16>
    %c1_81 = arith.constant 1 : index
    %c0_82 = arith.constant 0 : index
    %c0_83 = arith.constant 0 : index
    %239 = vector.load %arg5[%c1_81, %c0_82, %c0_83] : memref<2x64x128xbf16, #tpu.memory_space<vmem>>, vector<1x64x128xbf16>
    %240 = vector.shape_cast %239 : vector<1x64x128xbf16> to vector<64x128xbf16>
    %cst_84 = arith.constant dense<0.000000e+00> : vector<16x128xf32>
    %241 = tpu.matmul %238, %240, %cst_84 {dimension_numbers = #tpu.dot_dimension_numbers<[1], [0], [0], [1], [0, 0, 1, 1], [], []>} : vector<16x64xbf16>, vector<64x128xbf16>, vector<16x128xf32> -> vector<16x128xf32>
    %c15 = arith.constant 15 : index
    %c0_85 = arith.constant 0 : index
    %242 = vector.load %arg2[%c15, %c0_85] : memref<19x192xf32, #tpu.memory_space<vmem>>, vector<1x128xf32>
    %243 = vector.broadcast %242 : vector<1x128xf32> to vector<16x128xf32>
    %244 = arith.addf %241, %243 : vector<16x128xf32>
    %cst_86 = arith.constant 5.000000e-01 : f32
    %245 = vector.broadcast %cst_86 : f32 to vector<16x128xf32>
    %246 = arith.mulf %245, %244 : vector<16x128xf32>
    %cst_87 = arith.constant 4.471500e-02 : f32
    %247 = vector.broadcast %cst_87 : f32 to vector<16x128xf32>
    %248 = arith.mulf %247, %244 : vector<16x128xf32>
    %249 = arith.mulf %248, %244 : vector<16x128xf32>
    %250 = arith.mulf %249, %244 : vector<16x128xf32>
    %251 = arith.addf %244, %250 : vector<16x128xf32>
    %cst_88 = arith.constant 0.797884583 : f32
    %252 = vector.broadcast %cst_88 : f32 to vector<16x128xf32>
    %253 = arith.mulf %252, %251 : vector<16x128xf32>
    %254 = math.tanh %253 : vector<16x128xf32>
    %cst_89 = arith.constant 1.000000e+00 : f32
    %255 = vector.broadcast %cst_89 : f32 to vector<16x128xf32>
    %256 = arith.addf %255, %254 : vector<16x128xf32>
    %257 = arith.mulf %246, %256 : vector<16x128xf32>
    %258 = arith.truncf %257 : vector<16x128xf32> to vector<16x128xbf16>
    %c1_90 = arith.constant 1 : index
    %c0_91 = arith.constant 0 : index
    %c0_92 = arith.constant 0 : index
    %259 = vector.load %arg6[%c1_90, %c0_91, %c0_92] : memref<2x128x64xbf16, #tpu.memory_space<vmem>>, vector<1x128x64xbf16>
    %260 = vector.shape_cast %259 : vector<1x128x64xbf16> to vector<128x64xbf16>
    %cst_93 = arith.constant dense<0.000000e+00> : vector<16x64xf32>
    %261 = tpu.matmul %258, %260, %cst_93 {dimension_numbers = #tpu.dot_dimension_numbers<[1], [0], [0], [1], [0, 0, 1, 1], [], []>} : vector<16x128xbf16>, vector<128x64xbf16>, vector<16x64xf32> -> vector<16x64xf32>
    %c16 = arith.constant 16 : index
    %c0_94 = arith.constant 0 : index
    %262 = vector.load %arg2[%c16, %c0_94] : memref<19x192xf32, #tpu.memory_space<vmem>>, vector<1x64xf32>
    %263 = vector.broadcast %262 : vector<1x64xf32> to vector<16x64xf32>
    %264 = arith.addf %261, %263 : vector<16x64xf32>
    %265 = arith.addf %264, %237 : vector<16x64xf32>
    %c17 = arith.constant 17 : index
    %c0_95 = arith.constant 0 : index
    %266 = vector.load %arg2[%c17, %c0_95] : memref<19x192xf32, #tpu.memory_space<vmem>>, vector<1x64xf32>
    %c18 = arith.constant 18 : index
    %c0_96 = arith.constant 0 : index
    %267 = vector.load %arg2[%c18, %c0_96] : memref<19x192xf32, #tpu.memory_space<vmem>>, vector<1x64xf32>
    %cst_97 = arith.constant dense<0.000000e+00> : vector<16xf32>
    %268 = vector.multi_reduction <add>, %265, %cst_97 [1] : vector<16x64xf32> to vector<16xf32>
    %269 = vector.shape_cast %268 : vector<16xf32> to vector<16x1xf32>
    %cst_98 = arith.constant 6.400000e+01 : f32
    %270 = vector.broadcast %cst_98 : f32 to vector<16x1xf32>
    %271 = arith.divf %269, %270 : vector<16x1xf32>
    %272 = vector.broadcast %271 : vector<16x1xf32> to vector<16x64xf32>
    %273 = arith.subf %265, %272 : vector<16x64xf32>
    %274 = arith.mulf %273, %273 : vector<16x64xf32>
    %cst_99 = arith.constant dense<0.000000e+00> : vector<16xf32>
    %275 = vector.multi_reduction <add>, %274, %cst_99 [1] : vector<16x64xf32> to vector<16xf32>
    %276 = vector.shape_cast %275 : vector<16xf32> to vector<16x1xf32>
    %cst_100 = arith.constant 6.400000e+01 : f32
    %277 = vector.broadcast %cst_100 : f32 to vector<16x1xf32>
    %278 = arith.divf %276, %277 : vector<16x1xf32>
    %279 = vector.broadcast %271 : vector<16x1xf32> to vector<16x64xf32>
    %280 = arith.subf %265, %279 : vector<16x64xf32>
    %cst_101 = arith.constant 9.99999996E-13 : f32
    %281 = vector.broadcast %cst_101 : f32 to vector<16x1xf32>
    %282 = arith.addf %278, %281 : vector<16x1xf32>
    %283 = math.rsqrt %282 : vector<16x1xf32>
    %284 = vector.broadcast %283 : vector<16x1xf32> to vector<16x64xf32>
    %285 = arith.mulf %280, %284 : vector<16x64xf32>
    %286 = vector.broadcast %266 : vector<1x64xf32> to vector<16x64xf32>
    %287 = arith.mulf %285, %286 : vector<16x64xf32>
    %288 = vector.broadcast %267 : vector<1x64xf32> to vector<16x64xf32>
    %289 = arith.addf %287, %288 : vector<16x64xf32>
    %290 = vector.extract_strided_slice %289 {offsets = [0, 0], sizes = [1, 64], strides = [1, 1]} : vector<16x64xf32> to vector<1x64xf32>
    %291 = vector.extract_strided_slice %289 {offsets = [8, 0], sizes = [1, 64], strides = [1, 1]} : vector<16x64xf32> to vector<1x64xf32>
    %292 = tpu.concatenate %290, %291 in 0 : vector<1x64xf32>, vector<1x64xf32> -> vector<2x64xf32>
    %293 = arith.truncf %292 : vector<2x64xf32> to vector<2x64xbf16>
    %c0_102 = arith.constant 0 : index
    %c0_103 = arith.constant 0 : index
    %294 = vector.load %arg7[%c0_102, %c0_103] : memref<64x64xbf16, #tpu.memory_space<vmem>>, vector<64x64xbf16>
    %cst_104 = arith.constant dense<0.000000e+00> : vector<2x64xf32>
    %295 = tpu.matmul %293, %294, %cst_104 {dimension_numbers = #tpu.dot_dimension_numbers<[1], [0], [0], [1], [0, 0, 1, 1], [], []>} : vector<2x64xbf16>, vector<64x64xbf16>, vector<2x64xf32> -> vector<2x64xf32>
    %c2 = arith.constant 2 : index
    %c0_105 = arith.constant 0 : index
    %296 = vector.load %arg2[%c2, %c0_105] : memref<19x192xf32, #tpu.memory_space<vmem>>, vector<1x64xf32>
    %297 = vector.broadcast %296 : vector<1x64xf32> to vector<2x64xf32>
    %298 = arith.addf %295, %297 : vector<2x64xf32>
    %c0_106 = arith.constant 0 : index
    %c0_107 = arith.constant 0 : index
    %299 = vector.load %arg8[%c0_106, %c0_107] : memref<2x64xf32, #tpu.memory_space<vmem>>, vector<2x64xf32>
    tpu.vector_store %arg8[%c0_106, %c0_107], %298 {strides = array<i32>} : memref<2x64xf32, #tpu.memory_space<vmem>>, vector<2x64xf32>,
    return
  }
}

</mosaic_0001>

<llo_original>
// kernel: philoberta_forward.1
$region0: #{philoberta_forward.1}
  #allocation0 [shape = 'u32[]', space=smem, size = 0x4, offset = 0x4, fixed_abs, tag = 'smem constant byte address 0x4 - core index']
  #allocation1 [shape = 'u32[144,128]{1,0:T(1,128)}', space=vmem, size = 0x12000, scoped, tag = 'internal scratch']
  %s0 = inlined_call_operand.vmem [shape: f32[16,64], index: 0, kind: input, shape index: {}]
  %s1 = inlined_call_operand.vmem [shape: f32[16,16], index: 1, kind: input, shape index: {}]
  %s2 = inlined_call_operand.vmem [shape: f32[19,192], index: 2, kind: input, shape index: {}]
  %s3 = inlined_call_operand.vmem [shape: bf16[2,64,192], index: 3, kind: input, shape index: {}]
  %s4 = inlined_call_operand.vmem [shape: bf16[2,64,64], index: 4, kind: input, shape index: {}]
  %s5 = inlined_call_operand.vmem [shape: bf16[2,64,128], index: 5, kind: input, shape index: {}]
  %s6 = inlined_call_operand.vmem [shape: bf16[2,128,64], index: 6, kind: input, shape index: {}]
  %s7 = inlined_call_operand.vmem [shape: bf16[64,64], index: 7, kind: input, shape index: {}]
  %s8 = inlined_call_operand.hbm [shape: f32[2,64], index: 8, kind: output, shape index: {}]
  %s9 = sld [smem:[#allocation0]]
  $region42: #{philoberta_forward.1} parent=0
    _
  %s11 = ssub.s32 1, %s9
  %s12 = scalar_select 0, %s11, %s9
  $region1: #{philoberta_forward.1} parent=0
    #allocation2 [shape = 'u8[1024]{0}', space=vmem, size = 0x400, scoped, tag = 'output window, operand 0, single buffered']
    #allocation3 [shape = 's32[1]{0}', space=sflag, size = 0x4, scoped, tag = 'scoped memory for philoberta_forward.1']
    %13 = vsyncpa [#allocation3], 0
    // Predicated region
    $region2: #{philoberta_forward.1} parent=1 // pred_check
      _
    $region3: #{philoberta_forward.1} parent=1 // pred_check_branch
      %15 = sbr.rel (0) target = $region5
    $region4: #{philoberta_forward.1} parent=1 // pred_region
      _
    $region5: #{philoberta_forward.1} parent=1 // pred_fallthru
      _
    // Predicated region
    $region6: #{philoberta_forward.1} parent=1 // pred_check
      _
    $region7: #{philoberta_forward.1} parent=1 // pred_check_branch
      %17 = sbr.rel (0) target = $region9
    $region8: #{philoberta_forward.1} parent=1 // pred_region
      _
    $region9: #{philoberta_forward.1} parent=1 // pred_fallthru
      _
    // Predicated region
    $region10: #{philoberta_forward.1} parent=1 // pred_check
      _
    $region11: #{philoberta_forward.1} parent=1 // pred_check_branch
      %19 = sbr.rel (0) target = $region13
    $region12: #{philoberta_forward.1} parent=1 // pred_region
      _
    $region13: #{philoberta_forward.1} parent=1 // pred_fallthru
      _
    // Predicated region
    $region14: #{philoberta_forward.1} parent=1 // pred_check
      _
    $region15: #{philoberta_forward.1} parent=1 // pred_check_branch
      %21 = sbr.rel (0) target = $region17
    $region16: #{philoberta_forward.1} parent=1 // pred_region
      _
    $region17: #{philoberta_forward.1} parent=1 // pred_fallthru
      _
    // Predicated region
    $region18: #{philoberta_forward.1} parent=1 // pred_check
      _
    $region19: #{philoberta_forward.1} parent=1 // pred_check_branch
      %23 = sbr.rel (0) target = $region21
    $region20: #{philoberta_forward.1} parent=1 // pred_region
      _
    $region21: #{philoberta_forward.1} parent=1 // pred_fallthru
      _
    // Predicated region
    $region22: #{philoberta_forward.1} parent=1 // pred_check
      _
    $region23: #{philoberta_forward.1} parent=1 // pred_check_branch
      %25 = sbr.rel (0) target = $region25
    $region24: #{philoberta_forward.1} parent=1 // pred_region
      _
    $region25: #{philoberta_forward.1} parent=1 // pred_fallthru
      _
    // Predicated region
    $region26: #{philoberta_forward.1} parent=1 // pred_check
      _
    $region27: #{philoberta_forward.1} parent=1 // pred_check_branch
      %27 = sbr.rel (0) target = $region29
    $region28: #{philoberta_forward.1} parent=1 // pred_region
      _
    $region29: #{philoberta_forward.1} parent=1 // pred_fallthru
      _
    // Predicated region
    $region30: #{philoberta_forward.1} parent=1 // pred_check
      _
    $region31: #{philoberta_forward.1} parent=1 // pred_check_branch
      %29 = sbr.rel (0) target = $region33
    $region32: #{philoberta_forward.1} parent=1 // pred_region
      _
    $region33: #{philoberta_forward.1} parent=1 // pred_fallthru
      _
    %v31 = vld [vmem:[%s0] sm:$0xff]
    %v32 = vld [vmem:[%s0 + $0x8] sm:$0xff]
    %v33 = vld [vmem:[%s2] ss:$0 sm:$0xff]
    %v34 = vld [vmem:[%s2 + $0x1] ss:$0 sm:$0xff]
    %vm35 = vcmask 523264
    %v36 = vsel %vm35, %v31, 0.0
    %37 = vadd.xlane.f32.xlu0 %v36
    %v38 = vpop.xlane.xlu0 %37
    %v39 = vsel %vm35, %v32, 0.0
    %40 = vadd.xlane.f32.xlu0 %v39
    %v41 = vpop.xlane.xlu0 %40
    %v42 = vrcp.pop 64.0
    %v43 = vmul.f32 %v38, %v42
    %v44 = vmul.f32 %v41, %v42
    %v45 = vsub.f32 %v31, %v43
    %v46 = vsub.f32 %v32, %v44
    %v47 = vmul.f32 %v45, %v45
    %v48 = vmul.f32 %v46, %v46
    %v49 = vsel %vm35, %v47, 0.0
    %50 = vadd.xlane.f32.xlu0 %v49
    %v51 = vpop.xlane.xlu0 %50
    %v52 = vsel %vm35, %v48, 0.0
    %53 = vadd.xlane.f32.xlu0 %v52
    %v54 = vpop.xlane.xlu0 %53
    %v55 = vmul.f32 %v51, %v42
    %v56 = vmul.f32 %v54, %v42
    %v57 = vadd.f32 %v55, 1e-12
    %v58 = vadd.f32 %v56, 1e-12
    %v59 = vrsqrt.pop %v57
    %v60 = vrsqrt.pop %v58
    %v61 = vmul.f32 %v45, %v59
    %v62 = vmul.f32 %v46, %v60
    %v63 = vmul.f32 %v61, %v33
    %v64 = vmul.f32 %v62, %v33
    %v65 = vadd.f32 %v63, %v34
    %v66 = vadd.f32 %v64, %v34
    %v67 = vld [vmem:[%s1] sm:$0xff]
    %v68 = vld [vmem:[%s1 + $0x8] sm:$0xff]
    %v69 = vpack.c.bf16 %v66, %v65
    %v70 = vld [vmem:[%s3] sm:$0xff]
    %v71 = vld [vmem:[%s3 + $0x8] sm:$0xff]
    %v72 = vld [vmem:[%s3 + $0x10] sm:$0xff]
    %v73 = vld [vmem:[%s3 + $0x18] sm:$0xff]
    %v74 = vld [vmem:[%s3 + $0x20] sm:$0xff]
    %v75 = vld [vmem:[%s3 + $0x28] sm:$0xff]
    %v76 = vld [vmem:[%s3 + $0x30] sm:$0xff]
    %v77 = vld [vmem:[%s3 + $0x38] sm:$0xff]
    %s78 = scalar_lea.vmem %s2, 3
    %v79 = vld [vmem:[%s78] ss:$8 sm:$0x3]
    %v81 = vlaneseq
    %v82 = vshrl.u32 %v81, 7
    %v83 = vsub.s32 0, %v82
    %v84 = vrot.slane %v79, %v83
    %v85 = vlaneseq
    %v86 = vshrl.u32 %v85, 7
    %v87 = vsub.s32 1, %v86
    %v88 = vrot.slane %v79, %v87
    %v99 = vunpack.c.l.b16 %v70
    %v100 = vunpack.c.h.b16 %v70
    %v101 = vunpack.c.l.b16 %v71
    %v102 = vunpack.c.h.b16 %v71
    %v103 = vunpack.c.l.b16 %v72
    %v104 = vunpack.c.h.b16 %v72
    %v105 = vunpack.c.l.b16 %v73
    %v106 = vunpack.c.h.b16 %v73
    %v107 = vunpack.c.l.b16 %v74
    %v108 = vunpack.c.h.b16 %v74
    %v109 = vunpack.c.l.b16 %v75
    %v110 = vunpack.c.h.b16 %v75
    %v111 = vunpack.c.l.b16 %v76
    %v112 = vunpack.c.h.b16 %v76
    %v113 = vunpack.c.l.b16 %v77
    %v114 = vunpack.c.h.b16 %v77
    %v115 = vpack.c.b16 %v101, %v99
    %v116 = vpack.c.b16 %v102, %v100
    %v117 = vpack.c.b16 %v105, %v103
    %v118 = vpack.c.b16 %v106, %v104
    %v119 = vpack.c.b16 %v109, %v107
    %v120 = vpack.c.b16 %v110, %v108
    %v121 = vpack.c.b16 %v113, %v111
    %v122 = vpack.c.b16 %v114, %v112
    %v132 = vsel %vm35, %v69, 0
    %134 = vmatprep.subr.bf16.mxu0 %v116
    %135 = vmatpush1.bf16.msra.mxu0 %v115
    %136 = vmatprep.subr.bf16.mxu0 %v118
    %137 = vmatpush1.bf16.msra.mxu0 %v117
    %138 = vmatprep.subr.bf16.mxu0 %v120
    %139 = vmatpush1.bf16.msra.mxu0 %v119
    %140 = vmatprep.subr.bf16.mxu0 %v122
    %141 = vmatpush1.bf16.msra.mxu0 %v121
    %142 = vmatprep.subr.bf16.mxu0 0
    %143 = vmatpush1.bf16.msra.mxu0 0
    %144 = vmatprep.subr.bf16.mxu0 0
    %145 = vmatpush1.bf16.msra.mxu0 0
    %146 = vmatprep.subr.bf16.mxu0 0
    %147 = vmatpush1.bf16.msra.mxu0 0
    %148 = vmatprep.subr.bf16.mxu0 0
    %149 = vmatpush1.bf16.msra.mxu0 0
    %150 = vmatprep.subr.bf16.mxu0 0
    %151 = vmatpush1.bf16.msra.mxu0 0
    %152 = vmatprep.subr.bf16.mxu0 0
    %153 = vmatpush1.bf16.msra.mxu0 0
    %154 = vmatprep.subr.bf16.mxu0 0
    %155 = vmatpush1.bf16.msra.mxu0 0
    %156 = vmatprep.subr.bf16.mxu0 0
    %157 = vmatpush1.bf16.msra.mxu0 0
    %158 = vmatprep.subr.bf16.mxu0 0
    %159 = vmatpush1.bf16.msra.mxu0 0
    %160 = vmatprep.subr.bf16.mxu0 0
    %161 = vmatpush1.bf16.msra.mxu0 0
    %162 = vmatprep.subr.bf16.mxu0 0
    %163 = vmatpush1.bf16.msra.mxu0 0
    %164 = vmatprep.subr.bf16.mxu0 0
    %165 = vmatpush1.bf16.msra.mxu0 0
    %166 = vmatprep.mubr.bf16.mxu0 0
    %167 = vmatmul.mubr.bf16.gmra.mrb[0].mxu0 %v132
    %v168 = vpop.f32.mrb[0].mxu0
    %v169 = vadd.f32 %v84, %v168
    %v170 = vpop.f32.mrb[0].mxu0
    %v171 = vadd.f32 %v88, %v170
    %v172 = vpop.f32.mrb[0].mxu0
    %v173 = vadd.f32 %v84, %v172
    %v174 = vpop.f32.mrb[0].mxu0
    %v175 = vadd.f32 %v88, %v174
    %176 = vdwg.mxu0
    %v177 = vpack.c.bf16 %v173, %v169
    %v178 = vpack.c.bf16 %v175, %v171
    %180 = vrot.lane.b32.xlu0 %v177, 64
    %v181 = vpop.permute.xlu0 %180
    %vm182 = vcmask 261120
    %v184 = vsel %vm182, %v177, 0
    %v187 = vsel %vm182, %v181, 0
    %189 = vmatprep.subr.bf16.mxu0 0
    %190 = vmatpush1.bf16.xpose.msra.mxu0 %v187
    %191 = vmatprep.subr.bf16.mxu0 0
    %192 = vmatpush1.bf16.xpose.msra.mxu0 0
    %193 = vmatprep.subr.bf16.mxu0 0
    %194 = vmatpush1.bf16.xpose.msra.mxu0 0
    %195 = vmatprep.subr.bf16.mxu0 0
    %196 = vmatpush1.bf16.xpose.msra.mxu0 0
    %197 = vmatprep.subr.bf16.mxu0 0
    %198 = vmatpush1.bf16.xpose.msra.mxu0 0
    %199 = vmatprep.subr.bf16.mxu0 0
    %200 = vmatpush1.bf16.xpose.msra.mxu0 0
    %201 = vmatprep.subr.bf16.mxu0 0
    %202 = vmatpush1.bf16.xpose.msra.mxu0 0
    %203 = vmatprep.subr.bf16.mxu0 0
    %204 = vmatpush1.bf16.xpose.msra.mxu0 0
    %205 = vmatprep.subr.bf16.mxu0 0
    %206 = vmatpush1.bf16.xpose.msra.mxu0 0
    %207 = vmatprep.subr.bf16.mxu0 0
    %208 = vmatpush1.bf16.xpose.msra.mxu0 0
    %209 = vmatprep.subr.bf16.mxu0 0
    %210 = vmatpush1.bf16.xpose.msra.mxu0 0
    %211 = vmatprep.subr.bf16.mxu0 0
    %212 = vmatpush1.bf16.xpose.msra.mxu0 0
    %213 = vmatprep.subr.bf16.mxu0 0
    %214 = vmatpush1.bf16.xpose.msra.mxu0 0
    %215 = vmatprep.subr.bf16.mxu0 0
    %216 = vmatpush1.bf16.xpose.msra.mxu0 0
    %217 = vmatprep.subr.bf16.mxu0 0
    %218 = vmatpush1.bf16.xpose.msra.mxu0 0
    %219 = vmatprep.subr.bf16.mxu0 0
    %220 = vmatpush1.bf16.xpose.msra.mxu0 0
    %221 = vmatprep.mubr.bf16.mxu0 0
    %222 = vmatmul.mubr.bf16.gmra.mrb[0].mxu0 %v184
    %v223 = vpop.f32.mrb[0].mxu0
    %v224 = vadd.f32 %v67, %v223
    %v225 = vpop.f32.mrb[0].mxu0
    %v226 = vpop.f32.mrb[0].mxu0
    %v227 = vadd.f32 %v68, %v226
    %v228 = vpop.f32.mrb[0].mxu0
    %229 = vdwg.mxu0
    %vm230 = vcmask 130048
    %v231 = vsel %vm230, %v224, -inf
    %232 = vmax.xlane.f32.xlu0 %v231
    %v233 = vpop.xlane.xlu0 %232
    %v234 = vsel %vm230, %v227, -inf
    %235 = vmax.xlane.f32.xlu0 %v234
    %v236 = vpop.xlane.xlu0 %235
    %v237 = vsub.f32 %v224, %v233
    %v238 = vsub.f32 %v227, %v236
    %v239 = vmul.f32 %v237, 1.442695
    %v240 = vpow.pop %v239
    %v241 = vmul.f32 %v238, 1.442695
    %v242 = vpow.pop %v241
    %v243 = vsel %vm230, %v240, 0.0
    %244 = vadd.xlane.f32.xlu0 %v243
    %v245 = vpop.xlane.xlu0 %244
    %v246 = vsel %vm230, %v242, 0.0
    %247 = vadd.xlane.f32.xlu0 %v246
    %v248 = vpop.xlane.xlu0 %247
    %v249 = vrcp.pop %v245
    %v250 = vrcp.pop %v248
    %v251 = vmul.f32 %v240, %v249
    %v252 = vmul.f32 %v242, %v250
    %v253 = vpack.c.bf16 %v252, %v251
    %v255 = vsel %vm230, %v253, 0
    %257 = vmatprep.subr.bf16.mxu0 0
    %258 = vmatpush1.bf16.msra.mxu0 %v178
    %259 = vmatprep.subr.bf16.mxu0 0
    %260 = vmatpush1.bf16.msra.mxu0 0
    %261 = vmatprep.subr.bf16.mxu0 0
    %262 = vmatpush1.bf16.msra.mxu0 0
    %263 = vmatprep.subr.bf16.mxu0 0
    %264 = vmatpush1.bf16.msra.mxu0 0
    %265 = vmatprep.subr.bf16.mxu0 0
    %266 = vmatpush1.bf16.msra.mxu0 0
    %267 = vmatprep.subr.bf16.mxu0 0
    %268 = vmatpush1.bf16.msra.mxu0 0
    %269 = vmatprep.subr.bf16.mxu0 0
    %270 = vmatpush1.bf16.msra.mxu0 0
    %271 = vmatprep.subr.bf16.mxu0 0
    %272 = vmatpush1.bf16.msra.mxu0 0
    %273 = vmatprep.subr.bf16.mxu0 0
    %274 = vmatpush1.bf16.msra.mxu0 0
    %275 = vmatprep.subr.bf16.mxu0 0
    %276 = vmatpush1.bf16.msra.mxu0 0
    %277 = vmatprep.subr.bf16.mxu0 0
    %278 = vmatpush1.bf16.msra.mxu0 0
    %279 = vmatprep.subr.bf16.mxu0 0
    %280 = vmatpush1.bf16.msra.mxu0 0
    %281 = vmatprep.subr.bf16.mxu0 0
    %282 = vmatpush1.bf16.msra.mxu0 0
    %283 = vmatprep.subr.bf16.mxu0 0
    %284 = vmatpush1.bf16.msra.mxu0 0
    %285 = vmatprep.subr.bf16.mxu0 0
    %286 = vmatpush1.bf16.msra.mxu0 0
    %287 = vmatprep.subr.bf16.mxu0 0
    %288 = vmatpush1.bf16.msra.mxu0 0
    %289 = vmatprep.mubr.bf16.mxu0 0
    %290 = vmatmul.mubr.bf16.gmra.mrb[0].mxu0 %v255
    %v291 = vpop.f32.mrb[0].mxu0
    %v292 = vadd.f32 0.0, %v291
    %v293 = vpop.f32.mrb[0].mxu0
    %v294 = vpop.f32.mrb[0].mxu0
    %v295 = vadd.f32 0.0, %v294
    %v296 = vpop.f32.mrb[0].mxu0
    %297 = vdwg.mxu0
    %298 = vrot.lane.b32.xlu0 %v177, 96
    %v299 = vpop.permute.xlu0 %298
    %300 = vrot.lane.b32.xlu0 %v177, 32
    %v301 = vpop.permute.xlu0 %300
    %v303 = vsel %vm182, %v299, 0
    %v306 = vsel %vm182, %v301, 0
    %308 = vmatprep.subr.bf16.mxu0 0
    %309 = vmatpush1.bf16.xpose.msra.mxu0 %v306
    %310 = vmatprep.subr.bf16.mxu0 0
    %311 = vmatpush1.bf16.xpose.msra.mxu0 0
    %312 = vmatprep.subr.bf16.mxu0 0
    %313 = vmatpush1.bf16.xpose.msra.mxu0 0
    %314 = vmatprep.subr.bf16.mxu0 0
    %315 = vmatpush1.bf16.xpose.msra.mxu0 0
    %316 = vmatprep.subr.bf16.mxu0 0
    %317 = vmatpush1.bf16.xpose.msra.mxu0 0
    %318 = vmatprep.subr.bf16.mxu0 0
    %319 = vmatpush1.bf16.xpose.msra.mxu0 0
    %320 = vmatprep.subr.bf16.mxu0 0
    %321 = vmatpush1.bf16.xpose.msra.mxu0 0
    %322 = vmatprep.subr.bf16.mxu0 0
    %323 = vmatpush1.bf16.xpose.msra.mxu0 0
    %324 = vmatprep.subr.bf16.mxu0 0
    %325 = vmatpush1.bf16.xpose.msra.mxu0 0
    %326 = vmatprep.subr.bf16.mxu0 0
    %327 = vmatpush1.bf16.xpose.msra.mxu0 0
    %328 = vmatprep.subr.bf16.mxu0 0
    %329 = vmatpush1.bf16.xpose.msra.mxu0 0
    %330 = vmatprep.subr.bf16.mxu0 0
    %331 = vmatpush1.bf16.xpose.msra.mxu0 0
    %332 = vmatprep.subr.bf16.mxu0 0
    %333 = vmatpush1.bf16.xpose.msra.mxu0 0
    %334 = vmatprep.subr.bf16.mxu0 0
    %335 = vmatpush1.bf16.xpose.msra.mxu0 0
    %336 = vmatprep.subr.bf16.mxu0 0
    %337 = vmatpush1.bf16.xpose.msra.mxu0 0
    %338 = vmatprep.subr.bf16.mxu0 0
    %339 = vmatpush1.bf16.xpose.msra.mxu0 0
    %340 = vmatprep.mubr.bf16.mxu0 0
    %341 = vmatmul.mubr.bf16.gmra.mrb[0].mxu0 %v303
    %v342 = vpop.f32.mrb[0].mxu0
    %v343 = vadd.f32 %v67, %v342
    %v344 = vpop.f32.mrb[0].mxu0
    %v345 = vpop.f32.mrb[0].mxu0
    %v346 = vadd.f32 %v68, %v345
    %v347 = vpop.f32.mrb[0].mxu0
    %348 = vdwg.mxu0
    %v349 = vsel %vm230, %v343, -inf
    %350 = vmax.xlane.f32.xlu0 %v349
    %v351 = vpop.xlane.xlu0 %350
    %v352 = vsel %vm230, %v346, -inf
    %353 = vmax.xlane.f32.xlu0 %v352
    %v354 = vpop.xlane.xlu0 %353
    %v355 = vsub.f32 %v343, %v351
    %v356 = vsub.f32 %v346, %v354
    %v357 = vmul.f32 %v355, 1.442695
    %v358 = vpow.pop %v357
    %v359 = vmul.f32 %v356, 1.442695
    %v360 = vpow.pop %v359
    %v361 = vsel %vm230, %v358, 0.0
    %362 = vadd.xlane.f32.xlu0 %v361
    %v363 = vpop.xlane.xlu0 %362
    %v364 = vsel %vm230, %v360, 0.0
    %365 = vadd.xlane.f32.xlu0 %v364
    %v366 = vpop.xlane.xlu0 %365
    %v367 = vrcp.pop %v363
    %v368 = vrcp.pop %v366
    %v369 = vmul.f32 %v358, %v367
    %v370 = vmul.f32 %v360, %v368
    %v371 = vpack.c.bf16 %v370, %v369
    %373 = vrot.lane.b32.xlu0 %v178, 96
    %v374 = vpop.permute.xlu0 %373
    %v377 = vsel %vm230, %v371, 0
    %379 = vmatprep.subr.bf16.mxu0 0
    %380 = vmatpush1.bf16.msra.mxu0 %v374
    %381 = vmatprep.subr.bf16.mxu0 0
    %382 = vmatpush1.bf16.msra.mxu0 0
    %383 = vmatprep.subr.bf16.mxu0 0
    %384 = vmatpush1.bf16.msra.mxu0 0
    %385 = vmatprep.subr.bf16.mxu0 0
    %386 = vmatpush1.bf16.msra.mxu0 0
    %387 = vmatprep.subr.bf16.mxu0 0
    %388 = vmatpush1.bf16.msra.mxu0 0
    %389 = vmatprep.subr.bf16.mxu0 0
    %390 = vmatpush1.bf16.msra.mxu0 0
    %391 = vmatprep.subr.bf16.mxu0 0
    %392 = vmatpush1.bf16.msra.mxu0 0
    %393 = vmatprep.subr.bf16.mxu0 0
    %394 = vmatpush1.bf16.msra.mxu0 0
    %395 = vmatprep.subr.bf16.mxu0 0
    %396 = vmatpush1.bf16.msra.mxu0 0
    %397 = vmatprep.subr.bf16.mxu0 0
    %398 = vmatpush1.bf16.msra.mxu0 0
    %399 = vmatprep.subr.bf16.mxu0 0
    %400 = vmatpush1.bf16.msra.mxu0 0
    %401 = vmatprep.subr.bf16.mxu0 0
    %402 = vmatpush1.bf16.msra.mxu0 0
    %403 = vmatprep.subr.bf16.mxu0 0
    %404 = vmatpush1.bf16.msra.mxu0 0
    %405 = vmatprep.subr.bf16.mxu0 0
    %406 = vmatpush1.bf16.msra.mxu0 0
    %407 = vmatprep.subr.bf16.mxu0 0
    %408 = vmatpush1.bf16.msra.mxu0 0
    %409 = vmatprep.subr.bf16.mxu0 0
    %410 = vmatpush1.bf16.msra.mxu0 0
    %411 = vmatprep.mubr.bf16.mxu0 0
    %412 = vmatmul.mubr.bf16.gmra.mrb[0].mxu0 %v377
    %v413 = vpop.f32.mrb[0].mxu0
    %v414 = vadd.f32 0.0, %v413
    %v415 = vpop.f32.mrb[0].mxu0
    %v416 = vpop.f32.mrb[0].mxu0
    %v417 = vadd.f32 0.0, %v416
    %v418 = vpop.f32.mrb[0].mxu0
    %419 = vdwg.mxu0
    %422 = vrot.lane.b32.xlu0 %v414, 32
    %v423 = vpop.permute.xlu0 %422
    %424 = vrot.lane.b32.xlu0 %v417, 32
    %v425 = vpop.permute.xlu0 %424
    %v428 = vsel %vm182, %v292, %v423
    %v429 = vsel %vm182, %v295, %v425
    %v430 = vpack.c.bf16 %v429, %v428
    %v431 = vld [vmem:[%s4] sm:$0xf]
    %v432 = vld [vmem:[%s4 + $0x4] sm:$0xf]
    %v433 = vld [vmem:[%s4 + $0x8] sm:$0xf]
    %v434 = vld [vmem:[%s4 + $0xc] sm:$0xf]
    %v435 = vld [vmem:[%s4 + $0x10] sm:$0xf]
    %v436 = vld [vmem:[%s4 + $0x14] sm:$0xf]
    %v437 = vld [vmem:[%s4 + $0x18] sm:$0xf]
    %v438 = vld [vmem:[%s4 + $0x1c] sm:$0xf]
    %v439 = vld [vmem:[%s2 + $0x4] ss:$0 sm:$0xff]
    %v448 = vunpack.c.l.b16 %v431
    %v449 = vunpack.c.l.b16 %v432
    %v450 = vunpack.c.l.b16 %v433
    %v451 = vunpack.c.l.b16 %v434
    %v452 = vunpack.c.l.b16 %v435
    %v453 = vunpack.c.l.b16 %v436
    %v454 = vunpack.c.l.b16 %v437
    %v455 = vunpack.c.l.b16 %v438
    %v456 = vpack.c.b16 %v449, %v448
    %v457 = vpack.c.b16 %v451, %v450
    %v458 = vpack.c.b16 %v453, %v452
    %v459 = vpack.c.b16 %v455, %v454
    %v465 = vsel %vm35, %v430, 0
    %467 = vmatprep.subr.bf16.mxu0 0
    %468 = vmatpush1.bf16.msra.mxu0 %v456
    %469 = vmatprep.subr.bf16.mxu0 0
    %470 = vmatpush1.bf16.msra.mxu0 %v457
    %471 = vmatprep.subr.bf16.mxu0 0
    %472 = vmatpush1.bf16.msra.mxu0 %v458
    %473 = vmatprep.subr.bf16.mxu0 0
    %474 = vmatpush1.bf16.msra.mxu0 %v459
    %475 = vmatprep.subr.bf16.mxu0 0
    %476 = vmatpush1.bf16.msra.mxu0 0
    %477 = vmatprep.subr.bf16.mxu0 0
    %478 = vmatpush1.bf16.msra.mxu0 0
    %479 = vmatprep.subr.bf16.mxu0 0
    %480 = vmatpush1.bf16.msra.mxu0 0
    %481 = vmatprep.subr.bf16.mxu0 0
    %482 = vmatpush1.bf16.msra.mxu0 0
    %483 = vmatprep.subr.bf16.mxu0 0
    %484 = vmatpush1.bf16.msra.mxu0 0
    %485 = vmatprep.subr.bf16.mxu0 0
    %486 = vmatpush1.bf16.msra.mxu0 0
    %487 = vmatprep.subr.bf16.mxu0 0
    %488 = vmatpush1.bf16.msra.mxu0 0
    %489 = vmatprep.subr.bf16.mxu0 0
    %490 = vmatpush1.bf16.msra.mxu0 0
    %491 = vmatprep.subr.bf16.mxu0 0
    %492 = vmatpush1.bf16.msra.mxu0 0
    %493 = vmatprep.subr.bf16.mxu0 0
    %494 = vmatpush1.bf16.msra.mxu0 0
    %495 = vmatprep.subr.bf16.mxu0 0
    %496 = vmatpush1.bf16.msra.mxu0 0
    %497 = vmatprep.subr.bf16.mxu0 0
    %498 = vmatpush1.bf16.msra.mxu0 0
    %499 = vmatprep.mubr.bf16.mxu0 0
    %500 = vmatmul.mubr.bf16.gmra.mrb[0].mxu0 %v465
    %v501 = vpop.f32.mrb[0].mxu0
    %v502 = vadd.f32 %v439, %v501
    %v503 = vpop.f32.mrb[0].mxu0
    %v504 = vpop.f32.mrb[0].mxu0
    %v505 = vadd.f32 %v439, %v504
    %v506 = vpop.f32.mrb[0].mxu0
    %507 = vdwg.mxu0
    %v508 = vadd.f32 %v502, %v65
    %v509 = vadd.f32 %v505, %v66
    %v510 = vld [vmem:[%s2 + $0x5] ss:$0 sm:$0xff]
    %v511 = vld [vmem:[%s2 + $0x6] ss:$0 sm:$0xff]
    %v512 = vsel %vm35, %v508, 0.0
    %513 = vadd.xlane.f32.xlu0 %v512
    %v514 = vpop.xlane.xlu0 %513
    %v515 = vsel %vm35, %v509, 0.0
    %516 = vadd.xlane.f32.xlu0 %v515
    %v517 = vpop.xlane.xlu0 %516
    %v518 = vmul.f32 %v514, %v42
    %v519 = vmul.f32 %v517, %v42
    %v520 = vsub.f32 %v508, %v518
    %v521 = vsub.f32 %v509, %v519
    %v522 = vmul.f32 %v520, %v520
    %v523 = vmul.f32 %v521, %v521
    %v524 = vsel %vm35, %v522, 0.0
    %525 = vadd.xlane.f32.xlu0 %v524
    %v526 = vpop.xlane.xlu0 %525
    %v527 = vsel %vm35, %v523, 0.0
    %528 = vadd.xlane.f32.xlu0 %v527
    %v529 = vpop.xlane.xlu0 %528
    %v530 = vmul.f32 %v526, %v42
    %v531 = vmul.f32 %v529, %v42
    %v532 = vadd.f32 %v530, 1e-12
    %v533 = vadd.f32 %v531, 1e-12
    %v534 = vrsqrt.pop %v532
    %v535 = vrsqrt.pop %v533
    %v536 = vmul.f32 %v520, %v534
    %v537 = vmul.f32 %v521, %v535
    %v538 = vmul.f32 %v536, %v510
    %v539 = vmul.f32 %v537, %v510
    %v540 = vadd.f32 %v538, %v511
    %v541 = vadd.f32 %v539, %v511
    %v542 = vpack.c.bf16 %v541, %v540
    %v543 = vld [vmem:[%s5] sm:$0xf]
    %v544 = vld [vmem:[%s5 + $0x4] sm:$0xf]
    %v545 = vld [vmem:[%s5 + $0x8] sm:$0xf]
    %v546 = vld [vmem:[%s5 + $0xc] sm:$0xf]
    %v547 = vld [vmem:[%s5 + $0x10] sm:$0xf]
    %v548 = vld [vmem:[%s5 + $0x14] sm:$0xf]
    %v549 = vld [vmem:[%s5 + $0x18] sm:$0xf]
    %v550 = vld [vmem:[%s5 + $0x1c] sm:$0xf]
    %v551 = vld [vmem:[%s2 + $0x7] ss:$0 sm:$0xff]
    %v560 = vunpack.c.l.b16 %v543
    %v561 = vunpack.c.l.b16 %v544
    %v562 = vunpack.c.l.b16 %v545
    %v563 = vunpack.c.l.b16 %v546
    %v564 = vunpack.c.l.b16 %v547
    %v565 = vunpack.c.l.b16 %v548
    %v566 = vunpack.c.l.b16 %v549
    %v567 = vunpack.c.l.b16 %v550
    %v568 = vpack.c.b16 %v561, %v560
    %v569 = vpack.c.b16 %v563, %v562
    %v570 = vpack.c.b16 %v565, %v564
    %v571 = vpack.c.b16 %v567, %v566
    %v577 = vsel %vm35, %v542, 0
    %579 = vmatprep.subr.bf16.mxu0 0
    %580 = vmatpush1.bf16.msra.mxu0 %v568
    %581 = vmatprep.subr.bf16.mxu0 0
    %582 = vmatpush1.bf16.msra.mxu0 %v569
    %583 = vmatprep.subr.bf16.mxu0 0
    %584 = vmatpush1.bf16.msra.mxu0 %v570
    %585 = vmatprep.subr.bf16.mxu0 0
    %586 = vmatpush1.bf16.msra.mxu0 %v571
    %587 = vmatprep.subr.bf16.mxu0 0
    %588 = vmatpush1.bf16.msra.mxu0 0
    %589 = vmatprep.subr.bf16.mxu0 0
    %590 = vmatpush1.bf16.msra.mxu0 0
    %591 = vmatprep.subr.bf16.mxu0 0
    %592 = vmatpush1.bf16.msra.mxu0 0
    %593 = vmatprep.subr.bf16.mxu0 0
    %594 = vmatpush1.bf16.msra.mxu0 0
    %595 = vmatprep.subr.bf16.mxu0 0
    %596 = vmatpush1.bf16.msra.mxu0 0
    %597 = vmatprep.subr.bf16.mxu0 0
    %598 = vmatpush1.bf16.msra.mxu0 0
    %599 = vmatprep.subr.bf16.mxu0 0
    %600 = vmatpush1.bf16.msra.mxu0 0
    %601 = vmatprep.subr.bf16.mxu0 0
    %602 = vmatpush1.bf16.msra.mxu0 0
    %603 = vmatprep.subr.bf16.mxu0 0
    %604 = vmatpush1.bf16.msra.mxu0 0
    %605 = vmatprep.subr.bf16.mxu0 0
    %606 = vmatpush1.bf16.msra.mxu0 0
    %607 = vmatprep.subr.bf16.mxu0 0
    %608 = vmatpush1.bf16.msra.mxu0 0
    %609 = vmatprep.subr.bf16.mxu0 0
    %610 = vmatpush1.bf16.msra.mxu0 0
    %611 = vmatprep.mubr.bf16.mxu0 0
    %612 = vmatmul.mubr.bf16.gmra.mrb[0].mxu0 %v577
    %v613 = vpop.f32.mrb[0].mxu0
    %v614 = vadd.f32 %v551, %v613
    %v615 = vpop.f32.mrb[0].mxu0
    %v616 = vpop.f32.mrb[0].mxu0
    %v617 = vadd.f32 %v551, %v616
    %v618 = vpop.f32.mrb[0].mxu0
    %619 = vdwg.mxu0
    %v620 = vmul.f32 %v614, 0.5
    %v621 = vmul.f32 %v617, 0.5
    %v622 = vmul.f32 %v614, 0.044715
    %v623 = vmul.f32 %v617, 0.044715
    %v624 = vmul.f32 %v622, %v614
    %v625 = vmul.f32 %v623, %v617
    %v626 = vmul.f32 %v624, %v614
    %v627 = vmul.f32 %v625, %v617
    %v628 = vadd.f32 %v614, %v626
    %v629 = vadd.f32 %v617, %v627
    %v630 = vmul.f32 %v628, 0.7978846
    %v631 = vmul.f32 %v629, 0.7978846
    %v632 = vtanh.pop %v630
    %v633 = vtanh.pop %v631
    %v634 = vadd.f32 %v632, 1.0
    %v635 = vadd.f32 %v633, 1.0
    %v636 = vmul.f32 %v620, %v634
    %v637 = vmul.f32 %v621, %v635
    %v638 = vpack.c.bf16 %v637, %v636
    %v639 = vld [vmem:[%s6] sm:$0xf]
    %v640 = vld [vmem:[%s6 + $0x4] sm:$0xf]
    %v641 = vld [vmem:[%s6 + $0x8] sm:$0xf]
    %v642 = vld [vmem:[%s6 + $0xc] sm:$0xf]
    %v643 = vld [vmem:[%s6 + $0x10] sm:$0xf]
    %v644 = vld [vmem:[%s6 + $0x14] sm:$0xf]
    %v645 = vld [vmem:[%s6 + $0x18] sm:$0xf]
    %v646 = vld [vmem:[%s6 + $0x1c] sm:$0xf]
    %v647 = vld [vmem:[%s6 + $0x20] sm:$0xf]
    %v648 = vld [vmem:[%s6 + $0x24] sm:$0xf]
    %v649 = vld [vmem:[%s6 + $0x28] sm:$0xf]
    %v650 = vld [vmem:[%s6 + $0x2c] sm:$0xf]
    %v651 = vld [vmem:[%s6 + $0x30] sm:$0xf]
    %v652 = vld [vmem:[%s6 + $0x34] sm:$0xf]
    %v653 = vld [vmem:[%s6 + $0x38] sm:$0xf]
    %v654 = vld [vmem:[%s6 + $0x3c] sm:$0xf]
    %v655 = vld [vmem:[%s2 + $0x10] ss:$0 sm:$0xff]
    %v672 = vunpack.c.l.b16 %v639
    %v673 = vunpack.c.l.b16 %v640
    %v674 = vunpack.c.l.b16 %v641
    %v675 = vunpack.c.l.b16 %v642
    %v676 = vunpack.c.l.b16 %v643
    %v677 = vunpack.c.l.b16 %v644
    %v678 = vunpack.c.l.b16 %v645
    %v679 = vunpack.c.l.b16 %v646
    %v680 = vunpack.c.l.b16 %v647
    %v681 = vunpack.c.l.b16 %v648
    %v682 = vunpack.c.l.b16 %v649
    %v683 = vunpack.c.l.b16 %v650
    %v684 = vunpack.c.l.b16 %v651
    %v685 = vunpack.c.l.b16 %v652
    %v686 = vunpack.c.l.b16 %v653
    %v687 = vunpack.c.l.b16 %v654
    %v688 = vpack.c.b16 %v673, %v672
    %v689 = vpack.c.b16 %v675, %v674
    %v690 = vpack.c.b16 %v677, %v676
    %v691 = vpack.c.b16 %v679, %v678
    %v692 = vpack.c.b16 %v681, %v680
    %v693 = vpack.c.b16 %v683, %v682
    %v694 = vpack.c.b16 %v685, %v684
    %v695 = vpack.c.b16 %v687, %v686
    %704 = vmatprep.subr.bf16.mxu0 0
    %705 = vmatpush1.bf16.msra.mxu0 %v688
    %706 = vmatprep.subr.bf16.mxu0 0
    %707 = vmatpush1.bf16.msra.mxu0 %v689
    %708 = vmatprep.subr.bf16.mxu0 0
    %709 = vmatpush1.bf16.msra.mxu0 %v690
    %710 = vmatprep.subr.bf16.mxu0 0
    %711 = vmatpush1.bf16.msra.mxu0 %v691
    %712 = vmatprep.subr.bf16.mxu0 0
    %713 = vmatpush1.bf16.msra.mxu0 %v692
    %714 = vmatprep.subr.bf16.mxu0 0
    %715 = vmatpush1.bf16.msra.mxu0 %v693
    %716 = vmatprep.subr.bf16.mxu0 0
    %717 = vmatpush1.bf16.msra.mxu0 %v694
    %718 = vmatprep.subr.bf16.mxu0 0
    %719 = vmatpush1.bf16.msra.mxu0 %v695
    %720 = vmatprep.subr.bf16.mxu0 0
    %721 = vmatpush1.bf16.msra.mxu0 0
    %722 = vmatprep.subr.bf16.mxu0 0
    %723 = vmatpush1.bf16.msra.mxu0 0
    %724 = vmatprep.subr.bf16.mxu0 0
    %725 = vmatpush1.bf16.msra.mxu0 0
    %726 = vmatprep.subr.bf16.mxu0 0
    %727 = vmatpush1.bf16.msra.mxu0 0
    %728 = vmatprep.subr.bf16.mxu0 0
    %729 = vmatpush1.bf16.msra.mxu0 0
    %730 = vmatprep.subr.bf16.mxu0 0
    %731 = vmatpush1.bf16.msra.mxu0 0
    %732 = vmatprep.subr.bf16.mxu0 0
    %733 = vmatpush1.bf16.msra.mxu0 0
    %734 = vmatprep.subr.bf16.mxu0 0
    %735 = vmatpush1.bf16.msra.mxu0 0
    %736 = vmatprep.mubr.bf16.mxu0 0
    %737 = vmatmul.mubr.bf16.gmra.mrb[0].mxu0 %v638
    %v738 = vpop.f32.mrb[0].mxu0
    %v739 = vadd.f32 %v655, %v738
    %v740 = vpop.f32.mrb[0].mxu0
    %v741 = vpop.f32.mrb[0].mxu0
    %v742 = vadd.f32 %v655, %v741
    %v743 = vpop.f32.mrb[0].mxu0
    %744 = vdwg.mxu0
    %v745 = vadd.f32 %v739, %v540
    %v746 = vadd.f32 %v742, %v541
    %v747 = vld [vmem:[%s2 + $0x11] ss:$0 sm:$0xff]
    %v748 = vld [vmem:[%s2 + $0x12] ss:$0 sm:$0xff]
    %v749 = vsel %vm35, %v745, 0.0
    %750 = vadd.xlane.f32.xlu0 %v749
    %v751 = vpop.xlane.xlu0 %750
    %v752 = vsel %vm35, %v746, 0.0
    %753 = vadd.xlane.f32.xlu0 %v752
    %v754 = vpop.xlane.xlu0 %753
    %v755 = vmul.f32 %v751, %v42
    %v756 = vmul.f32 %v754, %v42
    %v757 = vsub.f32 %v745, %v755
    %v758 = vsub.f32 %v746, %v756
    %v759 = vmul.f32 %v757, %v757
    %v760 = vmul.f32 %v758, %v758
    %v761 = vsel %vm35, %v759, 0.0
    %762 = vadd.xlane.f32.xlu0 %v761
    %v763 = vpop.xlane.xlu0 %762
    %v764 = vsel %vm35, %v760, 0.0
    %765 = vadd.xlane.f32.xlu0 %v764
    %v766 = vpop.xlane.xlu0 %765
    %v767 = vmul.f32 %v763, %v42
    %v768 = vmul.f32 %v766, %v42
    %v769 = vadd.f32 %v767, 1e-12
    %v770 = vadd.f32 %v768, 1e-12
    %v771 = vrsqrt.pop %v769
    %v772 = vrsqrt.pop %v770
    %v773 = vmul.f32 %v757, %v771
    %v774 = vmul.f32 %v758, %v772
    %v775 = vmul.f32 %v773, %v747
    %v776 = vmul.f32 %v774, %v747
    %v777 = vadd.f32 %v775, %v748
    %v778 = vadd.f32 %v776, %v748
    %v779 = vpack.c.bf16 %v778, %v777
    %s780 = scalar_lea.vmem %s3, 64
    %v781 = vld [vmem:[%s780] sm:$0xff]
    %v782 = vld [vmem:[%s780 + $0x8] sm:$0xff]
    %v783 = vld [vmem:[%s780 + $0x10] sm:$0xff]
    %v784 = vld [vmem:[%s780 + $0x18] sm:$0xff]
    %v785 = vld [vmem:[%s780 + $0x20] sm:$0xff]
    %v786 = vld [vmem:[%s780 + $0x28] sm:$0xff]
    %v787 = vld [vmem:[%s780 + $0x30] sm:$0xff]
    %v788 = vld [vmem:[%s780 + $0x38] sm:$0xff]
    %s789 = scalar_lea.vmem %s2, 19
    %v790 = vld [vmem:[%s789] ss:$8 sm:$0x3]
    %v792 = vlaneseq
    %v793 = vshrl.u32 %v792, 7
    %v794 = vsub.s32 0, %v793
    %v795 = vrot.slane %v790, %v794
    %v796 = vlaneseq
    %v797 = vshrl.u32 %v796, 7
    %v798 = vsub.s32 1, %v797
    %v799 = vrot.slane %v790, %v798
    %v810 = vunpack.c.l.b16 %v781
    %v811 = vunpack.c.h.b16 %v781
    %v812 = vunpack.c.l.b16 %v782
    %v813 = vunpack.c.h.b16 %v782
    %v814 = vunpack.c.l.b16 %v783
    %v815 = vunpack.c.h.b16 %v783
    %v816 = vunpack.c.l.b16 %v784
    %v817 = vunpack.c.h.b16 %v784
    %v818 = vunpack.c.l.b16 %v785
    %v819 = vunpack.c.h.b16 %v785
    %v820 = vunpack.c.l.b16 %v786
    %v821 = vunpack.c.h.b16 %v786
    %v822 = vunpack.c.l.b16 %v787
    %v823 = vunpack.c.h.b16 %v787
    %v824 = vunpack.c.l.b16 %v788
    %v825 = vunpack.c.h.b16 %v788
    %v826 = vpack.c.b16 %v812, %v810
    %v827 = vpack.c.b16 %v813, %v811
    %v828 = vpack.c.b16 %v816, %v814
    %v829 = vpack.c.b16 %v817, %v815
    %v830 = vpack.c.b16 %v820, %v818
    %v831 = vpack.c.b16 %v821, %v819
    %v832 = vpack.c.b16 %v824, %v822
    %v833 = vpack.c.b16 %v825, %v823
    %v843 = vsel %vm35, %v779, 0
    %845 = vmatprep.subr.bf16.mxu0 %v827
    %846 = vmatpush1.bf16.msra.mxu0 %v826
    %847 = vmatprep.subr.bf16.mxu0 %v829
    %848 = vmatpush1.bf16.msra.mxu0 %v828
    %849 = vmatprep.subr.bf16.mxu0 %v831
    %850 = vmatpush1.bf16.msra.mxu0 %v830
    %851 = vmatprep.subr.bf16.mxu0 %v833
    %852 = vmatpush1.bf16.msra.mxu0 %v832
    %853 = vmatprep.subr.bf16.mxu0 0
    %854 = vmatpush1.bf16.msra.mxu0 0
    %855 = vmatprep.subr.bf16.mxu0 0
    %856 = vmatpush1.bf16.msra.mxu0 0
    %857 = vmatprep.subr.bf16.mxu0 0
    %858 = vmatpush1.bf16.msra.mxu0 0
    %859 = vmatprep.subr.bf16.mxu0 0
    %860 = vmatpush1.bf16.msra.mxu0 0
    %861 = vmatprep.subr.bf16.mxu0 0
    %862 = vmatpush1.bf16.msra.mxu0 0
    %863 = vmatprep.subr.bf16.mxu0 0
    %864 = vmatpush1.bf16.msra.mxu0 0
    %865 = vmatprep.subr.bf16.mxu0 0
    %866 = vmatpush1.bf16.msra.mxu0 0
    %867 = vmatprep.subr.bf16.mxu0 0
    %868 = vmatpush1.bf16.msra.mxu0 0
    %869 = vmatprep.subr.bf16.mxu0 0
    %870 = vmatpush1.bf16.msra.mxu0 0
    %871 = vmatprep.subr.bf16.mxu0 0
    %872 = vmatpush1.bf16.msra.mxu0 0
    %873 = vmatprep.subr.bf16.mxu0 0
    %874 = vmatpush1.bf16.msra.mxu0 0
    %875 = vmatprep.subr.bf16.mxu0 0
    %876 = vmatpush1.bf16.msra.mxu0 0
    %877 = vmatprep.mubr.bf16.mxu0 0
    %878 = vmatmul.mubr.bf16.gmra.mrb[0].mxu0 %v843
    %v879 = vpop.f32.mrb[0].mxu0
    %v880 = vadd.f32 %v795, %v879
    %v881 = vpop.f32.mrb[0].mxu0
    %v882 = vadd.f32 %v799, %v881
    %v883 = vpop.f32.mrb[0].mxu0
    %v884 = vadd.f32 %v795, %v883
    %v885 = vpop.f32.mrb[0].mxu0
    %v886 = vadd.f32 %v799, %v885
    %887 = vdwg.mxu0
    %v888 = vpack.c.bf16 %v884, %v880
    %v889 = vpack.c.bf16 %v886, %v882
    %891 = vrot.lane.b32.xlu0 %v888, 64
    %v892 = vpop.permute.xlu0 %891
    %v894 = vsel %vm182, %v888, 0
    %v897 = vsel %vm182, %v892, 0
    %899 = vmatprep.subr.bf16.mxu0 0
    %900 = vmatpush1.bf16.xpose.msra.mxu0 %v897
    %901 = vmatprep.subr.bf16.mxu0 0
    %902 = vmatpush1.bf16.xpose.msra.mxu0 0
    %903 = vmatprep.subr.bf16.mxu0 0
    %904 = vmatpush1.bf16.xpose.msra.mxu0 0
    %905 = vmatprep.subr.bf16.mxu0 0
    %906 = vmatpush1.bf16.xpose.msra.mxu0 0
    %907 = vmatprep.subr.bf16.mxu0 0
    %908 = vmatpush1.bf16.xpose.msra.mxu0 0
    %909 = vmatprep.subr.bf16.mxu0 0
    %910 = vmatpush1.bf16.xpose.msra.mxu0 0
    %911 = vmatprep.subr.bf16.mxu0 0
    %912 = vmatpush1.bf16.xpose.msra.mxu0 0
    %913 = vmatprep.subr.bf16.mxu0 0
    %914 = vmatpush1.bf16.xpose.msra.mxu0 0
    %915 = vmatprep.subr.bf16.mxu0 0
    %916 = vmatpush1.bf16.xpose.msra.mxu0 0
    %917 = vmatprep.subr.bf16.mxu0 0
    %918 = vmatpush1.bf16.xpose.msra.mxu0 0
    %919 = vmatprep.subr.bf16.mxu0 0
    %920 = vmatpush1.bf16.xpose.msra.mxu0 0
    %921 = vmatprep.subr.bf16.mxu0 0
    %922 = vmatpush1.bf16.xpose.msra.mxu0 0
    %923 = vmatprep.subr.bf16.mxu0 0
    %924 = vmatpush1.bf16.xpose.msra.mxu0 0
    %925 = vmatprep.subr.bf16.mxu0 0
    %926 = vmatpush1.bf16.xpose.msra.mxu0 0
    %927 = vmatprep.subr.bf16.mxu0 0
    %928 = vmatpush1.bf16.xpose.msra.mxu0 0
    %929 = vmatprep.subr.bf16.mxu0 0
    %930 = vmatpush1.bf16.xpose.msra.mxu0 0
    %931 = vmatprep.mubr.bf16.mxu0 0
    %932 = vmatmul.mubr.bf16.gmra.mrb[0].mxu0 %v894
    %v933 = vpop.f32.mrb[0].mxu0
    %v934 = vadd.f32 %v67, %v933
    %v935 = vpop.f32.mrb[0].mxu0
    %v936 = vpop.f32.mrb[0].mxu0
    %v937 = vadd.f32 %v68, %v936
    %v938 = vpop.f32.mrb[0].mxu0
    %939 = vdwg.mxu0
    %v940 = vsel %vm230, %v934, -inf
    %941 = vmax.xlane.f32.xlu0 %v940
    %v942 = vpop.xlane.xlu0 %941
    %v943 = vsel %vm230, %v937, -inf
    %944 = vmax.xlane.f32.xlu0 %v943
    %v945 = vpop.xlane.xlu0 %944
    %v946 = vsub.f32 %v934, %v942
    %v947 = vsub.f32 %v937, %v945
    %v948 = vmul.f32 %v946, 1.442695
    %v949 = vpow.pop %v948
    %v950 = vmul.f32 %v947, 1.442695
    %v951 = vpow.pop %v950
    %v952 = vsel %vm230, %v949, 0.0
    %953 = vadd.xlane.f32.xlu0 %v952
    %v954 = vpop.xlane.xlu0 %953
    %v955 = vsel %vm230, %v951, 0.0
    %956 = vadd.xlane.f32.xlu0 %v955
    %v957 = vpop.xlane.xlu0 %956
    %v958 = vrcp.pop %v954
    %v959 = vrcp.pop %v957
    %v960 = vmul.f32 %v949, %v958
    %v961 = vmul.f32 %v951, %v959
    %v962 = vpack.c.bf16 %v961, %v960
    %v964 = vsel %vm230, %v962, 0
    %966 = vmatprep.subr.bf16.mxu0 0
    %967 = vmatpush1.bf16.msra.mxu0 %v889
    %968 = vmatprep.subr.bf16.mxu0 0
    %969 = vmatpush1.bf16.msra.mxu0 0
    %970 = vmatprep.subr.bf16.mxu0 0
    %971 = vmatpush1.bf16.msra.mxu0 0
    %972 = vmatprep.subr.bf16.mxu0 0
    %973 = vmatpush1.bf16.msra.mxu0 0
    %974 = vmatprep.subr.bf16.mxu0 0
    %975 = vmatpush1.bf16.msra.mxu0 0
    %976 = vmatprep.subr.bf16.mxu0 0
    %977 = vmatpush1.bf16.msra.mxu0 0
    %978 = vmatprep.subr.bf16.mxu0 0
    %979 = vmatpush1.bf16.msra.mxu0 0
    %980 = vmatprep.subr.bf16.mxu0 0
    %981 = vmatpush1.bf16.msra.mxu0 0
    %982 = vmatprep.subr.bf16.mxu0 0
    %983 = vmatpush1.bf16.msra.mxu0 0
    %984 = vmatprep.subr.bf16.mxu0 0
    %985 = vmatpush1.bf16.msra.mxu0 0
    %986 = vmatprep.subr.bf16.mxu0 0
    %987 = vmatpush1.bf16.msra.mxu0 0
    %988 = vmatprep.subr.bf16.mxu0 0
    %989 = vmatpush1.bf16.msra.mxu0 0
    %990 = vmatprep.subr.bf16.mxu0 0
    %991 = vmatpush1.bf16.msra.mxu0 0
    %992 = vmatprep.subr.bf16.mxu0 0
    %993 = vmatpush1.bf16.msra.mxu0 0
    %994 = vmatprep.subr.bf16.mxu0 0
    %995 = vmatpush1.bf16.msra.mxu0 0
    %996 = vmatprep.subr.bf16.mxu0 0
    %997 = vmatpush1.bf16.msra.mxu0 0
    %998 = vmatprep.mubr.bf16.mxu0 0
    %999 = vmatmul.mubr.bf16.gmra.mrb[0].mxu0 %v964
    %v1000 = vpop.f32.mrb[0].mxu0
    %v1001 = vadd.f32 0.0, %v1000
    %v1002 = vpop.f32.mrb[0].mxu0
    %v1003 = vpop.f32.mrb[0].mxu0
    %v1004 = vadd.f32 0.0, %v1003
    %v1005 = vpop.f32.mrb[0].mxu0
    %1006 = vdwg.mxu0
    %1007 = vrot.lane.b32.xlu0 %v888, 96
    %v1008 = vpop.permute.xlu0 %1007
    %1009 = vrot.lane.b32.xlu0 %v888, 32
    %v1010 = vpop.permute.xlu0 %1009
    %v1012 = vsel %vm182, %v1008, 0
    %v1015 = vsel %vm182, %v1010, 0
    %1017 = vmatprep.subr.bf16.mxu0 0
    %1018 = vmatpush1.bf16.xpose.msra.mxu0 %v1015
    %1019 = vmatprep.subr.bf16.mxu0 0
    %1020 = vmatpush1.bf16.xpose.msra.mxu0 0
    %1021 = vmatprep.subr.bf16.mxu0 0
    %1022 = vmatpush1.bf16.xpose.msra.mxu0 0
    %1023 = vmatprep.subr.bf16.mxu0 0
    %1024 = vmatpush1.bf16.xpose.msra.mxu0 0
    %1025 = vmatprep.subr.bf16.mxu0 0
    %1026 = vmatpush1.bf16.xpose.msra.mxu0 0
    %1027 = vmatprep.subr.bf16.mxu0 0
    %1028 = vmatpush1.bf16.xpose.msra.mxu0 0
    %1029 = vmatprep.subr.bf16.mxu0 0
    %1030 = vmatpush1.bf16.xpose.msra.mxu0 0
    %1031 = vmatprep.subr.bf16.mxu0 0
    %1032 = vmatpush1.bf16.xpose.msra.mxu0 0
    %1033 = vmatprep.subr.bf16.mxu0 0
    %1034 = vmatpush1.bf16.xpose.msra.mxu0 0
    %1035 = vmatprep.subr.bf16.mxu0 0
    %1036 = vmatpush1.bf16.xpose.msra.mxu0 0
    %1037 = vmatprep.subr.bf16.mxu0 0
    %1038 = vmatpush1.bf16.xpose.msra.mxu0 0
    %1039 = vmatprep.subr.bf16.mxu0 0
    %1040 = vmatpush1.bf16.xpose.msra.mxu0 0
    %1041 = vmatprep.subr.bf16.mxu0 0
    %1042 = vmatpush1.bf16.xpose.msra.mxu0 0
    %1043 = vmatprep.subr.bf16.mxu0 0
    %1044 = vmatpush1.bf16.xpose.msra.mxu0 0
    %1045 = vmatprep.subr.bf16.mxu0 0
    %1046 = vmatpush1.bf16.xpose.msra.mxu0 0
    %1047 = vmatprep.subr.bf16.mxu0 0
    %1048 = vmatpush1.bf16.xpose.msra.mxu0 0
    %1049 = vmatprep.mubr.bf16.mxu0 0
    %1050 = vmatmul.mubr.bf16.gmra.mrb[0].mxu0 %v1012
    %v1051 = vpop.f32.mrb[0].mxu0
    %v1052 = vadd.f32 %v67, %v1051
    %v1053 = vpop.f32.mrb[0].mxu0
    %v1054 = vpop.f32.mrb[0].mxu0
    %v1055 = vadd.f32 %v68, %v1054
    %v1056 = vpop.f32.mrb[0].mxu0
    %1057 = vdwg.mxu0
    %v1058 = vsel %vm230, %v1052, -inf
    %1059 = vmax.xlane.f32.xlu0 %v1058
    %v1060 = vpop.xlane.xlu0 %1059
    %v1061 = vsel %vm230, %v1055, -inf
    %1062 = vmax.xlane.f32.xlu0 %v1061
    %v1063 = vpop.xlane.xlu0 %1062
    %v1064 = vsub.f32 %v1052, %v1060
    %v1065 = vsub.f32 %v1055, %v1063
    %v1066 = vmul.f32 %v1064, 1.442695
    %v1067 = vpow.pop %v1066
    %v1068 = vmul.f32 %v1065, 1.442695
    %v1069 = vpow.pop %v1068
    %v1070 = vsel %vm230, %v1067, 0.0
    %1071 = vadd.xlane.f32.xlu0 %v1070
    %v1072 = vpop.xlane.xlu0 %1071
    %v1073 = vsel %vm230, %v1069, 0.0
    %1074 = vadd.xlane.f32.xlu0 %v1073
    %v1075 = vpop.xlane.xlu0 %1074
    %v1076 = vrcp.pop %v1072
    %v1077 = vrcp.pop %v1075
    %v1078 = vmul.f32 %v1067, %v1076
    %v1079 = vmul.f32 %v1069, %v1077
    %v1080 = vpack.c.bf16 %v1079, %v1078
    %1082 = vrot.lane.b32.xlu0 %v889, 96
    %v1083 = vpop.permute.xlu0 %1082
    %v1086 = vsel %vm230, %v1080, 0
    %1088 = vmatprep.subr.bf16.mxu0 0
    %1089 = vmatpush1.bf16.msra.mxu0 %v1083
    %1090 = vmatprep.subr.bf16.mxu0 0
    %1091 = vmatpush1.bf16.msra.mxu0 0
    %1092 = vmatprep.subr.bf16.mxu0 0
    %1093 = vmatpush1.bf16.msra.mxu0 0
    %1094 = vmatprep.subr.bf16.mxu0 0
    %1095 = vmatpush1.bf16.msra.mxu0 0
    %1096 = vmatprep.subr.bf16.mxu0 0
    %1097 = vmatpush1.bf16.msra.mxu0 0
    %1098 = vmatprep.subr.bf16.mxu0 0
    %1099 = vmatpush1.bf16.msra.mxu0 0
    %1100 = vmatprep.subr.bf16.mxu0 0
    %1101 = vmatpush1.bf16.msra.mxu0 0
    %1102 = vmatprep.subr.bf16.mxu0 0
    %1103 = vmatpush1.bf16.msra.mxu0 0
    %1104 = vmatprep.subr.bf16.mxu0 0
    %1105 = vmatpush1.bf16.msra.mxu0 0
    %1106 = vmatprep.subr.bf16.mxu0 0
    %1107 = vmatpush1.bf16.msra.mxu0 0
    %1108 = vmatprep.subr.bf16.mxu0 0
    %1109 = vmatpush1.bf16.msra.mxu0 0
    %1110 = vmatprep.subr.bf16.mxu0 0
    %1111 = vmatpush1.bf16.msra.mxu0 0
    %1112 = vmatprep.subr.bf16.mxu0 0
    %1113 = vmatpush1.bf16.msra.mxu0 0
    %1114 = vmatprep.subr.bf16.mxu0 0
    %1115 = vmatpush1.bf16.msra.mxu0 0
    %1116 = vmatprep.subr.bf16.mxu0 0
    %1117 = vmatpush1.bf16.msra.mxu0 0
    %1118 = vmatprep.subr.bf16.mxu0 0
    %1119 = vmatpush1.bf16.msra.mxu0 0
    %1120 = vmatprep.mubr.bf16.mxu0 0
    %1121 = vmatmul.mubr.bf16.gmra.mrb[0].mxu0 %v1086
    %v1122 = vpop.f32.mrb[0].mxu0
    %v1123 = vadd.f32 0.0, %v1122
    %v1124 = vpop.f32.mrb[0].mxu0
    %v1125 = vpop.f32.mrb[0].mxu0
    %v1126 = vadd.f32 0.0, %v1125
    %v1127 = vpop.f32.mrb[0].mxu0
    %1128 = vdwg.mxu0
    %1131 = vrot.lane.b32.xlu0 %v1123, 32
    %v1132 = vpop.permute.xlu0 %1131
    %1133 = vrot.lane.b32.xlu0 %v1126, 32
    %v1134 = vpop.permute.xlu0 %1133
    %v1137 = vsel %vm182, %v1001, %v1132
    %v1138 = vsel %vm182, %v1004, %v1134
    %v1139 = vpack.c.bf16 %v1138, %v1137
    %s1140 = scalar_lea.vmem %s4, 32
    %v1141 = vld [vmem:[%s1140] sm:$0xf]
    %v1142 = vld [vmem:[%s1140 + $0x4] sm:$0xf]
    %v1143 = vld [vmem:[%s1140 + $0x8] sm:$0xf]
    %v1144 = vld [vmem:[%s1140 + $0xc] sm:$0xf]
    %v1145 = vld [vmem:[%s1140 + $0x10] sm:$0xf]
    %v1146 = vld [vmem:[%s1140 + $0x14] sm:$0xf]
    %v1147 = vld [vmem:[%s1140 + $0x18] sm:$0xf]
    %v1148 = vld [vmem:[%s1140 + $0x1c] sm:$0xf]
    %v1149 = vld [vmem:[%s2 + $0x14] ss:$0 sm:$0xff]
    %v1158 = vunpack.c.l.b16 %v1141
    %v1159 = vunpack.c.l.b16 %v1142
    %v1160 = vunpack.c.l.b16 %v1143
    %v1161 = vunpack.c.l.b16 %v1144
    %v1162 = vunpack.c.l.b16 %v1145
    %v1163 = vunpack.c.l.b16 %v1146
    %v1164 = vunpack.c.l.b16 %v1147
    %v1165 = vunpack.c.l.b16 %v1148
    %v1166 = vpack.c.b16 %v1159, %v1158
    %v1167 = vpack.c.b16 %v1161, %v1160
    %v1168 = vpack.c.b16 %v1163, %v1162
    %v1169 = vpack.c.b16 %v1165, %v1164
    %v1175 = vsel %vm35, %v1139, 0
    %1177 = vmatprep.subr.bf16.mxu0 0
    %1178 = vmatpush1.bf16.msra.mxu0 %v1166
    %1179 = vmatprep.subr.bf16.mxu0 0
    %1180 = vmatpush1.bf16.msra.mxu0 %v1167
    %1181 = vmatprep.subr.bf16.mxu0 0
    %1182 = vmatpush1.bf16.msra.mxu0 %v1168
    %1183 = vmatprep.subr.bf16.mxu0 0
    %1184 = vmatpush1.bf16.msra.mxu0 %v1169
    %1185 = vmatprep.subr.bf16.mxu0 0
    %1186 = vmatpush1.bf16.msra.mxu0 0
    %1187 = vmatprep.subr.bf16.mxu0 0
    %1188 = vmatpush1.bf16.msra.mxu0 0
    %1189 = vmatprep.subr.bf16.mxu0 0
    %1190 = vmatpush1.bf16.msra.mxu0 0
    %1191 = vmatprep.subr.bf16.mxu0 0
    %1192 = vmatpush1.bf16.msra.mxu0 0
    %1193 = vmatprep.subr.bf16.mxu0 0
    %1194 = vmatpush1.bf16.msra.mxu0 0
    %1195 = vmatprep.subr.bf16.mxu0 0
    %1196 = vmatpush1.bf16.msra.mxu0 0
    %1197 = vmatprep.subr.bf16.mxu0 0
    %1198 = vmatpush1.bf16.msra.mxu0 0
    %1199 = vmatprep.subr.bf16.mxu0 0
    %1200 = vmatpush1.bf16.msra.mxu0 0
    %1201 = vmatprep.subr.bf16.mxu0 0
    %1202 = vmatpush1.bf16.msra.mxu0 0
    %1203 = vmatprep.subr.bf16.mxu0 0
    %1204 = vmatpush1.bf16.msra.mxu0 0
    %1205 = vmatprep.subr.bf16.mxu0 0
    %1206 = vmatpush1.bf16.msra.mxu0 0
    %1207 = vmatprep.subr.bf16.mxu0 0
    %1208 = vmatpush1.bf16.msra.mxu0 0
    %1209 = vmatprep.mubr.bf16.mxu0 0
    %1210 = vmatmul.mubr.bf16.gmra.mrb[0].mxu0 %v1175
    %v1211 = vpop.f32.mrb[0].mxu0
    %v1212 = vadd.f32 %v1149, %v1211
    %v1213 = vpop.f32.mrb[0].mxu0
    %v1214 = vpop.f32.mrb[0].mxu0
    %v1215 = vadd.f32 %v1149, %v1214
    %v1216 = vpop.f32.mrb[0].mxu0
    %1217 = vdwg.mxu0
    %v1218 = vadd.f32 %v1212, %v777
    %v1219 = vadd.f32 %v1215, %v778
    %v1220 = vld [vmem:[%s2 + $0x15] ss:$0 sm:$0xff]
    %v1221 = vld [vmem:[%s2 + $0x16] ss:$0 sm:$0xff]
    %v1222 = vsel %vm35, %v1218, 0.0
    %1223 = vadd.xlane.f32.xlu0 %v1222
    %v1224 = vpop.xlane.xlu0 %1223
    %v1225 = vsel %vm35, %v1219, 0.0
    %1226 = vadd.xlane.f32.xlu0 %v1225
    %v1227 = vpop.xlane.xlu0 %1226
    %v1228 = vmul.f32 %v1224, %v42
    %v1229 = vmul.f32 %v1227, %v42
    %v1230 = vsub.f32 %v1218, %v1228
    %v1231 = vsub.f32 %v1219, %v1229
    %v1232 = vmul.f32 %v1230, %v1230
    %v1233 = vmul.f32 %v1231, %v1231
    %v1234 = vsel %vm35, %v1232, 0.0
    %1235 = vadd.xlane.f32.xlu0 %v1234
    %v1236 = vpop.xlane.xlu0 %1235
    %v1237 = vsel %vm35, %v1233, 0.0
    %1238 = vadd.xlane.f32.xlu0 %v1237
    %v1239 = vpop.xlane.xlu0 %1238
    %v1240 = vmul.f32 %v1236, %v42
    %v1241 = vmul.f32 %v1239, %v42
    %v1242 = vadd.f32 %v1240, 1e-12
    %v1243 = vadd.f32 %v1241, 1e-12
    %v1244 = vrsqrt.pop %v1242
    %v1245 = vrsqrt.pop %v1243
    %v1246 = vmul.f32 %v1230, %v1244
    %v1247 = vmul.f32 %v1231, %v1245
    %v1248 = vmul.f32 %v1246, %v1220
    %v1249 = vmul.f32 %v1247, %v1220
    %v1250 = vadd.f32 %v1248, %v1221
    %v1251 = vadd.f32 %v1249, %v1221
    %v1252 = vpack.c.bf16 %v1251, %v1250
    %s1253 = scalar_lea.vmem %s5, 32
    %v1254 = vld [vmem:[%s1253] sm:$0xf]
    %v1255 = vld [vmem:[%s1253 + $0x4] sm:$0xf]
    %v1256 = vld [vmem:[%s1253 + $0x8] sm:$0xf]
    %v1257 = vld [vmem:[%s1253 + $0xc] sm:$0xf]
    %v1258 = vld [vmem:[%s1253 + $0x10] sm:$0xf]
    %v1259 = vld [vmem:[%s1253 + $0x14] sm:$0xf]
    %v1260 = vld [vmem:[%s1253 + $0x18] sm:$0xf]
    %v1261 = vld [vmem:[%s1253 + $0x1c] sm:$0xf]
    %v1262 = vld [vmem:[%s2 + $0x17] ss:$0 sm:$0xff]
    %v1271 = vunpack.c.l.b16 %v1254
    %v1272 = vunpack.c.l.b16 %v1255
    %v1273 = vunpack.c.l.b16 %v1256
    %v1274 = vunpack.c.l.b16 %v1257
    %v1275 = vunpack.c.l.b16 %v1258
    %v1276 = vunpack.c.l.b16 %v1259
    %v1277 = vunpack.c.l.b16 %v1260
    %v1278 = vunpack.c.l.b16 %v1261
    %v1279 = vpack.c.b16 %v1272, %v1271
    %v1280 = vpack.c.b16 %v1274, %v1273
    %v1281 = vpack.c.b16 %v1276, %v1275
    %v1282 = vpack.c.b16 %v1278, %v1277
    %v1288 = vsel %vm35, %v1252, 0
    %1290 = vmatprep.subr.bf16.mxu0 0
    %1291 = vmatpush1.bf16.msra.mxu0 %v1279
    %1292 = vmatprep.subr.bf16.mxu0 0
    %1293 = vmatpush1.bf16.msra.mxu0 %v1280
    %1294 = vmatprep.subr.bf16.mxu0 0
    %1295 = vmatpush1.bf16.msra.mxu0 %v1281
    %1296 = vmatprep.subr.bf16.mxu0 0
    %1297 = vmatpush1.bf16.msra.mxu0 %v1282
    %1298 = vmatprep.subr.bf16.mxu0 0
    %1299 = vmatpush1.bf16.msra.mxu0 0
    %1300 = vmatprep.subr.bf16.mxu0 0
    %1301 = vmatpush1.bf16.msra.mxu0 0
    %1302 = vmatprep.subr.bf16.mxu0 0
    %1303 = vmatpush1.bf16.msra.mxu0 0
    %1304 = vmatprep.subr.bf16.mxu0 0
    %1305 = vmatpush1.bf16.msra.mxu0 0
    %1306 = vmatprep.subr.bf16.mxu0 0
    %1307 = vmatpush1.bf16.msra.mxu0 0
    %1308 = vmatprep.subr.bf16.mxu0 0
    %1309 = vmatpush1.bf16.msra.mxu0 0
    %1310 = vmatprep.subr.bf16.mxu0 0
    %1311 = vmatpush1.bf16.msra.mxu0 0
    %1312 = vmatprep.subr.bf16.mxu0 0
    %1313 = vmatpush1.bf16.msra.mxu0 0
    %1314 = vmatprep.subr.bf16.mxu0 0
    %1315 = vmatpush1.bf16.msra.mxu0 0
    %1316 = vmatprep.subr.bf16.mxu0 0
    %1317 = vmatpush1.bf16.msra.mxu0 0
    %1318 = vmatprep.subr.bf16.mxu0 0
    %1319 = vmatpush1.bf16.msra.mxu0 0
    %1320 = vmatprep.subr.bf16.mxu0 0
    %1321 = vmatpush1.bf16.msra.mxu0 0
    %1322 = vmatprep.mubr.bf16.mxu0 0
    %1323 = vmatmul.mubr.bf16.gmra.mrb[0].mxu0 %v1288
    %v1324 = vpop.f32.mrb[0].mxu0
    %v1325 = vadd.f32 %v1262, %v1324
    %v1326 = vpop.f32.mrb[0].mxu0
    %v1327 = vpop.f32.mrb[0].mxu0
    %v1328 = vadd.f32 %v1262, %v1327
    %v1329 = vpop.f32.mrb[0].mxu0
    %1330 = vdwg.mxu0
    %v1331 = vmul.f32 %v1325, 0.5
    %v1332 = vmul.f32 %v1328, 0.5
    %v1333 = vmul.f32 %v1325, 0.044715
    %v1334 = vmul.f32 %v1328, 0.044715
    %v1335 = vmul.f32 %v1333, %v1325
    %v1336 = vmul.f32 %v1334, %v1328
    %v1337 = vmul.f32 %v1335, %v1325
    %v1338 = vmul.f32 %v1336, %v1328
    %v1339 = vadd.f32 %v1325, %v1337
    %v1340 = vadd.f32 %v1328, %v1338
    %v1341 = vmul.f32 %v1339, 0.7978846
    %v1342 = vmul.f32 %v1340, 0.7978846
    %v1343 = vtanh.pop %v1341
    %v1344 = vtanh.pop %v1342
    %v1345 = vadd.f32 %v1343, 1.0
    %v1346 = vadd.f32 %v1344, 1.0
    %v1347 = vmul.f32 %v1331, %v1345
    %v1348 = vmul.f32 %v1332, %v1346
    %v1349 = vpack.c.bf16 %v1348, %v1347
    %s1350 = scalar_lea.vmem %s6, 64
    %v1351 = vld [vmem:[%s1350] sm:$0xf]
    %v1352 = vld [vmem:[%s1350 + $0x4] sm:$0xf]
    %v1353 = vld [vmem:[%s1350 + $0x8] sm:$0xf]
    %v1354 = vld [vmem:[%s1350 + $0xc] sm:$0xf]
    %v1355 = vld [vmem:[%s1350 + $0x10] sm:$0xf]
    %v1356 = vld [vmem:[%s1350 + $0x14] sm:$0xf]
    %v1357 = vld [vmem:[%s1350 + $0x18] sm:$0xf]
    %v1358 = vld [vmem:[%s1350 + $0x1c] sm:$0xf]
    %v1359 = vld [vmem:[%s1350 + $0x20] sm:$0xf]
    %v1360 = vld [vmem:[%s1350 + $0x24] sm:$0xf]
    %v1361 = vld [vmem:[%s1350 + $0x28] sm:$0xf]
    %v1362 = vld [vmem:[%s1350 + $0x2c] sm:$0xf]
    %v1363 = vld [vmem:[%s1350 + $0x30] sm:$0xf]
    %v1364 = vld [vmem:[%s1350 + $0x34] sm:$0xf]
    %v1365 = vld [vmem:[%s1350 + $0x38] sm:$0xf]
    %v1366 = vld [vmem:[%s1350 + $0x3c] sm:$0xf]
    %v1367 = vld [vmem:[%s2 + $0x20] ss:$0 sm:$0xff]
    %v1384 = vunpack.c.l.b16 %v1351
    %v1385 = vunpack.c.l.b16 %v1352
    %v1386 = vunpack.c.l.b16 %v1353
    %v1387 = vunpack.c.l.b16 %v1354
    %v1388 = vunpack.c.l.b16 %v1355
    %v1389 = vunpack.c.l.b16 %v1356
    %v1390 = vunpack.c.l.b16 %v1357
    %v1391 = vunpack.c.l.b16 %v1358
    %v1392 = vunpack.c.l.b16 %v1359
    %v1393 = vunpack.c.l.b16 %v1360
    %v1394 = vunpack.c.l.b16 %v1361
    %v1395 = vunpack.c.l.b16 %v1362
    %v1396 = vunpack.c.l.b16 %v1363
    %v1397 = vunpack.c.l.b16 %v1364
    %v1398 = vunpack.c.l.b16 %v1365
    %v1399 = vunpack.c.l.b16 %v1366
    %v1400 = vpack.c.b16 %v1385, %v1384
    %v1401 = vpack.c.b16 %v1387, %v1386
    %v1402 = vpack.c.b16 %v1389, %v1388
    %v1403 = vpack.c.b16 %v1391, %v1390
    %v1404 = vpack.c.b16 %v1393, %v1392
    %v1405 = vpack.c.b16 %v1395, %v1394
    %v1406 = vpack.c.b16 %v1397, %v1396
    %v1407 = vpack.c.b16 %v1399, %v1398
    %1416 = vmatprep.subr.bf16.mxu0 0
    %1417 = vmatpush1.bf16.msra.mxu0 %v1400
    %1418 = vmatprep.subr.bf16.mxu0 0
    %1419 = vmatpush1.bf16.msra.mxu0 %v1401
    %1420 = vmatprep.subr.bf16.mxu0 0
    %1421 = vmatpush1.bf16.msra.mxu0 %v1402
    %1422 = vmatprep.subr.bf16.mxu0 0
    %1423 = vmatpush1.bf16.msra.mxu0 %v1403
    %1424 = vmatprep.subr.bf16.mxu0 0
    %1425 = vmatpush1.bf16.msra.mxu0 %v1404
    %1426 = vmatprep.subr.bf16.mxu0 0
    %1427 = vmatpush1.bf16.msra.mxu0 %v1405
    %1428 = vmatprep.subr.bf16.mxu0 0
    %1429 = vmatpush1.bf16.msra.mxu0 %v1406
    %1430 = vmatprep.subr.bf16.mxu0 0
    %1431 = vmatpush1.bf16.msra.mxu0 %v1407
    %1432 = vmatprep.subr.bf16.mxu0 0
    %1433 = vmatpush1.bf16.msra.mxu0 0
    %1434 = vmatprep.subr.bf16.mxu0 0
    %1435 = vmatpush1.bf16.msra.mxu0 0
    %1436 = vmatprep.subr.bf16.mxu0 0
    %1437 = vmatpush1.bf16.msra.mxu0 0
    %1438 = vmatprep.subr.bf16.mxu0 0
    %1439 = vmatpush1.bf16.msra.mxu0 0
    %1440 = vmatprep.subr.bf16.mxu0 0
    %1441 = vmatpush1.bf16.msra.mxu0 0
    %1442 = vmatprep.subr.bf16.mxu0 0
    %1443 = vmatpush1.bf16.msra.mxu0 0
    %1444 = vmatprep.subr.bf16.mxu0 0
    %1445 = vmatpush1.bf16.msra.mxu0 0
    %1446 = vmatprep.subr.bf16.mxu0 0
    %1447 = vmatpush1.bf16.msra.mxu0 0
    %1448 = vmatprep.mubr.bf16.mxu0 0
    %1449 = vmatmul.mubr.bf16.gmra.mrb[0].mxu0 %v1349
    %v1450 = vpop.f32.mrb[0].mxu0
    %v1451 = vadd.f32 %v1367, %v1450
    %v1452 = vpop.f32.mrb[0].mxu0
    %v1453 = vpop.f32.mrb[0].mxu0
    %v1454 = vadd.f32 %v1367, %v1453
    %v1455 = vpop.f32.mrb[0].mxu0
    %1456 = vdwg.mxu0
    %v1457 = vadd.f32 %v1451, %v1250
    %v1458 = vadd.f32 %v1454, %v1251
    %v1459 = vld [vmem:[%s2 + $0x21] ss:$0 sm:$0xff]
    %v1460 = vld [vmem:[%s2 + $0x22] ss:$0 sm:$0xff]
    %v1461 = vsel %vm35, %v1457, 0.0
    %1462 = vadd.xlane.f32.xlu0 %v1461
    %v1463 = vpop.xlane.xlu0 %1462
    %v1464 = vsel %vm35, %v1458, 0.0
    %1465 = vadd.xlane.f32.xlu0 %v1464
    %v1466 = vpop.xlane.xlu0 %1465
    %v1467 = vmul.f32 %v1463, %v42
    %v1468 = vmul.f32 %v1466, %v42
    %v1469 = vsub.f32 %v1457, %v1467
    %v1470 = vsub.f32 %v1458, %v1468
    %v1471 = vmul.f32 %v1469, %v1469
    %v1472 = vmul.f32 %v1470, %v1470
    %v1473 = vsel %vm35, %v1471, 0.0
    %1474 = vadd.xlane.f32.xlu0 %v1473
    %v1475 = vpop.xlane.xlu0 %1474
    %v1476 = vsel %vm35, %v1472, 0.0
    %1477 = vadd.xlane.f32.xlu0 %v1476
    %v1478 = vpop.xlane.xlu0 %1477
    %v1479 = vmul.f32 %v1475, %v42
    %v1480 = vmul.f32 %v1478, %v42
    %v1481 = vadd.f32 %v1479, 1e-12
    %v1482 = vadd.f32 %v1480, 1e-12
    %v1483 = vrsqrt.pop %v1481
    %v1484 = vrsqrt.pop %v1482
    %v1485 = vmul.f32 %v1469, %v1483
    %v1486 = vmul.f32 %v1470, %v1484
    %v1487 = vmul.f32 %v1485, %v1459
    %v1488 = vmul.f32 %v1486, %v1459
    %v1489 = vadd.f32 %v1487, %v1460
    %v1490 = vadd.f32 %v1488, %v1460
    %v1492 = vrot.slane %v1490, 7
    %vm1494 = vcmask 1040384
    %v1495 = vsel %vm1494, %v1489, %v1492
    %v1496 = vpack.c.bf16 %v1495, %v1495
    %v1497 = vld [vmem:[%s7] sm:$0xf]
    %v1498 = vld [vmem:[%s7 + $0x4] sm:$0xf]
    %v1499 = vld [vmem:[%s7 + $0x8] sm:$0xf]
    %v1500 = vld [vmem:[%s7 + $0xc] sm:$0xf]
    %v1501 = vld [vmem:[%s7 + $0x10] sm:$0xf]
    %v1502 = vld [vmem:[%s7 + $0x14] sm:$0xf]
    %v1503 = vld [vmem:[%s7 + $0x18] sm:$0xf]
    %v1504 = vld [vmem:[%s7 + $0x1c] sm:$0xf]
    %v1505 = vld [vmem:[%s2 + $0x2] ss:$0 sm:$0xff]
    %v1514 = vunpack.c.l.b16 %v1497
    %v1515 = vunpack.c.l.b16 %v1498
    %v1516 = vunpack.c.l.b16 %v1499
    %v1517 = vunpack.c.l.b16 %v1500
    %v1518 = vunpack.c.l.b16 %v1501
    %v1519 = vunpack.c.l.b16 %v1502
    %v1520 = vunpack.c.l.b16 %v1503
    %v1521 = vunpack.c.l.b16 %v1504
    %v1522 = vpack.c.b16 %v1515, %v1514
    %v1523 = vpack.c.b16 %v1517, %v1516
    %v1524 = vpack.c.b16 %v1519, %v1518
    %v1525 = vpack.c.b16 %v1521, %v1520
    %v1531 = vsel %vm35, %v1496, 0
    %1533 = vmatprep.subr.bf16.mxu0 0
    %1534 = vmatpush1.bf16.msra.mxu0 %v1522
    %1535 = vmatprep.subr.bf16.mxu0 0
    %1536 = vmatpush1.bf16.msra.mxu0 %v1523
    %1537 = vmatprep.subr.bf16.mxu0 0
    %1538 = vmatpush1.bf16.msra.mxu0 %v1524
    %1539 = vmatprep.subr.bf16.mxu0 0
    %1540 = vmatpush1.bf16.msra.mxu0 %v1525
    %1541 = vmatprep.subr.bf16.mxu0 0
    %1542 = vmatpush1.bf16.msra.mxu0 0
    %1543 = vmatprep.subr.bf16.mxu0 0
    %1544 = vmatpush1.bf16.msra.mxu0 0
    %1545 = vmatprep.subr.bf16.mxu0 0
    %1546 = vmatpush1.bf16.msra.mxu0 0
    %1547 = vmatprep.subr.bf16.mxu0 0
    %1548 = vmatpush1.bf16.msra.mxu0 0
    %1549 = vmatprep.subr.bf16.mxu0 0
    %1550 = vmatpush1.bf16.msra.mxu0 0
    %1551 = vmatprep.subr.bf16.mxu0 0
    %1552 = vmatpush1.bf16.msra.mxu0 0
    %1553 = vmatprep.subr.bf16.mxu0 0
    %1554 = vmatpush1.bf16.msra.mxu0 0
    %1555 = vmatprep.subr.bf16.mxu0 0
    %1556 = vmatpush1.bf16.msra.mxu0 0
    %1557 = vmatprep.subr.bf16.mxu0 0
    %1558 = vmatpush1.bf16.msra.mxu0 0
    %1559 = vmatprep.subr.bf16.mxu0 0
    %1560 = vmatpush1.bf16.msra.mxu0 0
    %1561 = vmatprep.subr.bf16.mxu0 0
    %1562 = vmatpush1.bf16.msra.mxu0 0
    %1563 = vmatprep.subr.bf16.mxu0 0
    %1564 = vmatpush1.bf16.msra.mxu0 0
    %1565 = vmatprep.mubr.bf16.mxu0 0
    %1566 = vmatmul.mubr.bf16.gmra.mrb[0].mxu0 %v1531
    %v1567 = vpop.f32.mrb[0].mxu0
    %v1568 = vadd.f32 %v1505, %v1567
    %v1569 = vpop.f32.mrb[0].mxu0
    %v1570 = vpop.f32.mrb[0].mxu0
    %v1571 = vpop.f32.mrb[0].mxu0
    %1572 = vdwg.mxu0
    %vm1573 = vcmask 517120
    %1574 = vst.msk [vmem:[#allocation2] sm:$0x3] %vm1573, %v1568
    // Predicated region
    $region34: #{philoberta_forward.1} parent=1 // pred_check
      _
    $region35: #{philoberta_forward.1} parent=1 // pred_check_branch
      %1576 = sbr.rel (0) target = $region37
    $region36: #{philoberta_forward.1} parent=1 // pred_region
      %s1578 = ssub.s32 32, 32
      %1579 = vsyncadd [#allocation3], %s1578
      %s1581 = sshll.u32 [#allocation2], 4
      %s1582 = int_to_ptr.vmem [resolvable:$true] %s1581
      %1584 = dma.vmem_to_hbm [thread:$0]  %s1582, 32, %s8, [#allocation3]
    $region37: #{philoberta_forward.1} parent=1 // pred_fallthru
      _
    // Predicated region
    $region38: #{philoberta_forward.1} parent=1 // pred_check
      _
    $region39: #{philoberta_forward.1} parent=1 // pred_check_branch
      %1586 = sbr.rel (0) target = $region41
    $region40: #{philoberta_forward.1} parent=1 // pred_region
      %1587 = dma.done [#allocation3], 32
    $region41: #{philoberta_forward.1} parent=1 // pred_fallthru
      _
    %1588 = vsyncpa [#allocation3], 1

</llo_original>
